<compile_context>
chip_gen: v7x
topology: tpu7x:2x2x1
jax: 0.10.0
libtpu: 0.0.40
codegen_flags: <defaults>
</compile_context>

<pallas_src>
import functools

import numpy as np
import jax
import jax.numpy as jnp
from jax import lax
from jax.experimental import pallas as pl
from jax.experimental.pallas import tpu as pltpu


def _hausdorff_kernel(pred_r_ref, pred_c_ref, tgt_r_ref, tgt_c_ref,
                      rr_r_ref, cc_r_ref, rr_c_ref, cc_c_ref,
                      out_ref, *, alpha, tb):
    """One grid step = TB batch items.

    pred_r_ref / tgt_r_ref : (TB, 1, N) float32   lane-oriented rows
    pred_c_ref / tgt_c_ref : (TB, N, 1) float32   sublane-oriented columns (same data)
    rr_r_ref / cc_r_ref    : (1, N)     float32   pixel row / col coordinates (lane axis)
    rr_c_ref / cc_c_ref    : (N, 1)     float32   pixel row / col coordinates (sublane axis)
    out_ref                : (TB, 1)    float32   per-item sum of (pred-tgt)^2 * (dt_p^a + dt_t^a)
    """
    BIG = jnp.float32(1e30)

    # Pairwise SQUARED pixel distances, generated on the fly (shared by all TB items
    # and by both pred/target fields). Small-int values, exact in f32.
    dr = rr_c_ref[...] - rr_r_ref[...]            # (N, N)
    dc = cc_c_ref[...] - cc_r_ref[...]            # (N, N)
    d2 = dr * dr + dc * dc                        # (N, N)

    def field_sq(vals_col, vals_row):
        # Squared distance field: for pixel j, squared distance to the nearest pixel of
        # the opposite class.  Equivalent to edt(fg)+edt(bg) of the reference (squared).
        mask_col = vals_col > 0.5                 # (N, 1)  class of pixel i
        mask_row = vals_row > 0.5                 # (1, N)  class of pixel j
        opp = mask_col != mask_row                # (N, N)  classes differ
        cand = jnp.where(opp, d2, BIG)
        f2 = jnp.min(cand, axis=0, keepdims=True)  # (1, N), lane-dense
        # Pixels with no opposite-class pixel (all-fg or all-bg image) -> 0.
        # TODO(synk): scipy's edt on an all-foreground (zero-free) mask is a degenerate
        # corner case; as in the reference loop for all-background, it is zeroed here.
        return jnp.where(f2 > BIG * 0.5, 0.0, f2)

    def dist_pow(f2):
        # field**alpha == (field^2)**(alpha/2); alpha == 2 needs no sqrt / pow at all.
        if float(alpha) == 2.0:
            return f2
        return jnp.power(f2, jnp.float32(float(alpha) * 0.5))

    def body(t, carry):
        p_row = pred_r_ref[t]                     # (1, N)
        t_row = tgt_r_ref[t]                      # (1, N)
        p_col = pred_c_ref[t]                     # (N, 1)
        t_col = tgt_c_ref[t]                      # (N, 1)

        pred_f2 = field_sq(p_col, p_row)          # (1, N)
        tgt_f2 = field_sq(t_col, t_row)           # (1, N)

        err = p_row - t_row
        term = (err * err) * (dist_pow(pred_f2) + dist_pow(tgt_f2))      # (1, N)
        out_ref[pl.ds(t, 1), :] = jnp.sum(term, axis=-1, keepdims=True)  # (1, 1)
        return carry

    lax.fori_loop(0, tb, body, jnp.float32(0.0), unroll=True)


def hausdorff_dt_loss(pred, target, alpha=2.0):
    """Forward pass of HausdorffDTLoss. pred/target: (B, 1, H, W) float32."""
    B, C, H, W = pred.shape
    assert C == 1, "HausdorffDTLoss uses one binary channel"
    N = H * W

    # Batch tiling: TB items per grid step. TB is either the full batch (B <= 8) or 8
    # (keeps the (TB, 1) output block a legal multiple of 8 sublanes when tiled).
    if B <= 8:
        tb = B
    else:
        tb = 8
    b_pad = tb * int(pl.cdiv(B, tb))
    g = b_pad // tb

    pred_f = pred.reshape(B, N).astype(jnp.float32)
    tgt_f = target.reshape(B, N).astype(jnp.float32)
    if b_pad != B:
        pad = ((0, b_pad - B), (0, 0))
        pred_f = jnp.pad(pred_f, pad)   # zero items contribute exactly 0 to the sum
        tgt_f = jnp.pad(tgt_f, pad)

    pred_r = pred_f.reshape(b_pad, 1, N)
    tgt_r = tgt_f.reshape(b_pad, 1, N)
    pred_c = pred_f.reshape(b_pad, N, 1)
    tgt_c = tgt_f.reshape(b_pad, N, 1)

    # Pixel coordinates (pure geometry; O(N), no (N,N) matrix in HBM).
    rows, cols = jnp.meshgrid(
        jnp.arange(H, dtype=jnp.float32),
        jnp.arange(W, dtype=jnp.float32),
        indexing="ij",
    )
    rows = rows.reshape(-1)
    cols = cols.reshape(-1)
    rr_row = rows.reshape(1, N)
    cc_row = cols.reshape(1, N)
    rr_col = rows.reshape(N, 1)
    cc_col = cols.reshape(N, 1)

    kernel = functools.partial(_hausdorff_kernel, alpha=alpha, tb=tb)

    partials = pl.pallas_call(
        kernel,
        out_shape=jax.ShapeDtypeStruct((b_pad, 1), jnp.float32),
        grid_spec=pltpu.PrefetchScalarGridSpec(
            num_scalar_prefetch=0,
            grid=(g,),
            in_specs=[
                pl.BlockSpec((tb, 1, N), lambda i: (i, 0, 0)),   # pred rows
                pl.BlockSpec((tb, N, 1), lambda i: (i, 0, 0)),   # pred cols
                pl.BlockSpec((tb, 1, N), lambda i: (i, 0, 0)),   # target rows
                pl.BlockSpec((tb, N, 1), lambda i: (i, 0, 0)),   # target cols
                pl.BlockSpec((1, N), lambda i: (0, 0)),          # row coords (lanes)
                pl.BlockSpec((1, N), lambda i: (0, 0)),          # col coords (lanes)
                pl.BlockSpec((N, 1), lambda i: (0, 0)),          # row coords (sublanes)
                pl.BlockSpec((N, 1), lambda i: (0, 0)),          # col coords (sublanes)
            ],
            out_specs=pl.BlockSpec((tb, 1), lambda i: (i, 0)),
        ),
        compiler_params=pltpu.CompilerParams(
            dimension_semantics=("parallel",)),
    )(pred_r, pred_c, tgt_r, tgt_c, rr_row, cc_row, rr_col, cc_col)

    return jnp.sum(partials) / jnp.float32(B * C * H * W)


def _reference_loss(pred, target, alpha=2.0):
    """Pure-numpy reference (brute-force EDT == scipy edt when both fg & bg exist)."""
    pred = np.asarray(pred, dtype=np.float32)
    target = np.asarray(target, dtype=np.float32)
    B, C, H, W = pred.shape
    rr, cc = np.meshgrid(np.arange(H), np.arange(W), indexing="ij")
    coords = np.stack([rr.ravel(), cc.ravel()], -1).astype(np.float32)
    D = np.sqrt(((coords[:, None, :] - coords[None, :, :]) ** 2).sum(-1))

    def dfield(img):
        field = np.zeros((B, C * H * W), dtype=np.float32)
        flat = img.reshape(B, -1)
        for b in range(B):
            mask = flat[b] > 0.5
            if mask.any():
                fg = np.where(mask, np.where(~mask[None, :], D, np.inf).min(-1), 0.0)
                bg = np.where(~mask, np.where(mask[None, :], D, np.inf).min(-1), 0.0)
                fg = np.where(np.isinf(fg), 0.0, fg)
                bg = np.where(np.isinf(bg), 0.0, bg)
                field[b] = (fg + bg).astype(np.float32)
        return field.reshape(img.shape)

    pdt, tdt = dfield(pred), dfield(target)
    err = (pred - target) ** 2
    dist = pdt ** alpha + tdt ** alpha
    return float((err * dist).mean())


if __name__ == "__main__":
    key = jax.random.PRNGKey(0)
    k1, k2 = jax.random.split(key)
    B, C, H, W = 2, 1, 16, 16
    pred = jax.random.uniform(k1, (B, C, H, W), dtype=jnp.float32)
    target = (jax.random.uniform(k2, (B, C, H, W), dtype=jnp.float32) > 0.5).astype(
        jnp.float32
    )

    loss = hausdorff_dt_loss(pred, target, alpha=2.0)
    loss = jax.block_until_ready(loss)

    ref = _reference_loss(np.asarray(pred), np.asarray(target), alpha=2.0)
    assert abs(float(loss) - ref) < 1e-3 * max(1.0, abs(ref)), (float(loss), ref)

    print("KERNEL_OK")
</pallas_src>

<mosaic_0001>
module attributes {stable_mosaic.version = 11 : i64} {
  func.func @_hausdorff_kernel(%arg0: i32, %arg1: memref<2x1x256xf32, #tpu.memory_space<vmem>>, %arg2: memref<2x256x1xf32, #tpu.memory_space<vmem>>, %arg3: memref<2x1x256xf32, #tpu.memory_space<vmem>>, %arg4: memref<2x256x1xf32, #tpu.memory_space<vmem>>, %arg5: memref<1x256xf32, #tpu.memory_space<vmem>>, %arg6: memref<1x256xf32, #tpu.memory_space<vmem>>, %arg7: memref<256x1xf32, #tpu.memory_space<vmem>>, %arg8: memref<256x1xf32, #tpu.memory_space<vmem>>, %arg9: memref<2x1xf32, #tpu.memory_space<vmem>>) attributes {dimension_semantics = [#tpu.dimension_semantics<parallel>], iteration_bounds = array<i64: 1>, scalar_prefetch = 0 : i64, scratch_operands = 0 : i64, tpu.core_type = #tpu.core_type<tc>, window_params = [{transform_indices = @transform_0, window_bounds = array<i64: 2, 1, 256>}, {transform_indices = @transform_1, window_bounds = array<i64: 2, 256, 1>}, {transform_indices = @transform_2, window_bounds = array<i64: 2, 1, 256>}, {transform_indices = @transform_3, window_bounds = array<i64: 2, 256, 1>}, {pipeline_mode = #tpu.pipeline_mode<synchronous>, transform_indices = @transform_4, window_bounds = array<i64: 1, 256>}, {pipeline_mode = #tpu.pipeline_mode<synchronous>, transform_indices = @transform_5, window_bounds = array<i64: 1, 256>}, {pipeline_mode = #tpu.pipeline_mode<synchronous>, transform_indices = @transform_6, window_bounds = array<i64: 256, 1>}, {pipeline_mode = #tpu.pipeline_mode<synchronous>, transform_indices = @transform_7, window_bounds = array<i64: 256, 1>}, {transform_indices = @transform_8, window_bounds = array<i64: 2, 1>}]} {
    %c0 = arith.constant 0 : index
    %c0_0 = arith.constant 0 : index
    %0 = vector.load %arg7[%c0, %c0_0] : memref<256x1xf32, #tpu.memory_space<vmem>>, vector<256x1xf32>
    %c0_1 = arith.constant 0 : index
    %c0_2 = arith.constant 0 : index
    %1 = vector.load %arg5[%c0_1, %c0_2] : memref<1x256xf32, #tpu.memory_space<vmem>>, vector<1x256xf32>
    %2 = vector.broadcast %0 : vector<256x1xf32> to vector<256x256xf32>
    %3 = vector.broadcast %1 : vector<1x256xf32> to vector<256x256xf32>
    %4 = arith.subf %2, %3 : vector<256x256xf32>
    %c0_3 = arith.constant 0 : index
    %c0_4 = arith.constant 0 : index
    %5 = vector.load %arg8[%c0_3, %c0_4] : memref<256x1xf32, #tpu.memory_space<vmem>>, vector<256x1xf32>
    %c0_5 = arith.constant 0 : index
    %c0_6 = arith.constant 0 : index
    %6 = vector.load %arg6[%c0_5, %c0_6] : memref<1x256xf32, #tpu.memory_space<vmem>>, vector<1x256xf32>
    %7 = vector.broadcast %5 : vector<256x1xf32> to vector<256x256xf32>
    %8 = vector.broadcast %6 : vector<1x256xf32> to vector<256x256xf32>
    %9 = arith.subf %7, %8 : vector<256x256xf32>
    %10 = arith.mulf %4, %4 : vector<256x256xf32>
    %11 = arith.mulf %9, %9 : vector<256x256xf32>
    %12 = arith.addf %10, %11 : vector<256x256xf32>
    %cst = arith.constant 1.000000e+30 : f32
    %c0_i32 = arith.constant 0 : i32
    %13 = arith.index_cast %c0_i32 : i32 to index
    %c0_7 = arith.constant 0 : index
    %c0_8 = arith.constant 0 : index
    %14 = vector.load %arg1[%13, %c0_7, %c0_8] : memref<2x1x256xf32, #tpu.memory_space<vmem>>, vector<1x1x256xf32>
    %15 = vector.shape_cast %14 : vector<1x1x256xf32> to vector<1x256xf32>
    %16 = arith.index_cast %c0_i32 : i32 to index
    %c0_9 = arith.constant 0 : index
    %c0_10 = arith.constant 0 : index
    %17 = vector.load %arg3[%16, %c0_9, %c0_10] : memref<2x1x256xf32, #tpu.memory_space<vmem>>, vector<1x1x256xf32>
    %18 = vector.shape_cast %17 : vector<1x1x256xf32> to vector<1x256xf32>
    %19 = arith.index_cast %c0_i32 : i32 to index
    %c0_11 = arith.constant 0 : index
    %c0_12 = arith.constant 0 : index
    %20 = vector.load %arg2[%19, %c0_11, %c0_12] : memref<2x256x1xf32, #tpu.memory_space<vmem>>, vector<1x256x1xf32>
    %21 = vector.shape_cast %20 : vector<1x256x1xf32> to vector<256x1xf32>
    %22 = arith.index_cast %c0_i32 : i32 to index
    %c0_13 = arith.constant 0 : index
    %c0_14 = arith.constant 0 : index
    %23 = vector.load %arg4[%22, %c0_13, %c0_14] : memref<2x256x1xf32, #tpu.memory_space<vmem>>, vector<1x256x1xf32>
    %24 = vector.shape_cast %23 : vector<1x256x1xf32> to vector<256x1xf32>
    %cst_15 = arith.constant 5.000000e-01 : f32
    %25 = vector.broadcast %cst_15 : f32 to vector<256x1xf32>
    %26 = arith.cmpf ogt, %21, %25 : vector<256x1xf32>
    %cst_16 = arith.constant 5.000000e-01 : f32
    %27 = vector.broadcast %cst_16 : f32 to vector<1x256xf32>
    %28 = arith.cmpf ogt, %15, %27 : vector<1x256xf32>
    %29 = vector.broadcast %26 : vector<256x1xi1> to vector<256x256xi1>
    %30 = vector.broadcast %28 : vector<1x256xi1> to vector<256x256xi1>
    %31 = vector.broadcast %29 : vector<256x256xi1> to vector<256x256xi1>
    %32 = vector.broadcast %30 : vector<256x256xi1> to vector<256x256xi1>
    %33 = arith.xori %31, %32 : vector<256x256xi1>
    %34 = vector.broadcast %cst : f32 to vector<256x256xf32>
    %35 = arith.select %33, %12, %34 : vector<256x256xi1>, vector<256x256xf32>
    %cst_17 = arith.constant dense<0x7F800000> : vector<256xf32>
    %36 = vector.multi_reduction <minimumf>, %35, %cst_17 [0] : vector<256x256xf32> to vector<256xf32>
    %37 = vector.shape_cast %36 : vector<256xf32> to vector<1x256xf32>
    %cst_18 = arith.constant 5.000000e-01 : f32
    %38 = arith.mulf %cst, %cst_18 : f32
    %39 = vector.broadcast %38 : f32 to vector<1x256xf32>
    %40 = arith.cmpf ogt, %37, %39 : vector<1x256xf32>
    %cst_19 = arith.constant 0.000000e+00 : f32
    %41 = vector.broadcast %cst_19 : f32 to vector<1x256xf32>
    %42 = arith.select %40, %41, %37 : vector<1x256xi1>, vector<1x256xf32>
    %cst_20 = arith.constant 5.000000e-01 : f32
    %43 = vector.broadcast %cst_20 : f32 to vector<256x1xf32>
    %44 = arith.cmpf ogt, %24, %43 : vector<256x1xf32>
    %cst_21 = arith.constant 5.000000e-01 : f32
    %45 = vector.broadcast %cst_21 : f32 to vector<1x256xf32>
    %46 = arith.cmpf ogt, %18, %45 : vector<1x256xf32>
    %47 = vector.broadcast %44 : vector<256x1xi1> to vector<256x256xi1>
    %48 = vector.broadcast %46 : vector<1x256xi1> to vector<256x256xi1>
    %49 = vector.broadcast %47 : vector<256x256xi1> to vector<256x256xi1>
    %50 = vector.broadcast %48 : vector<256x256xi1> to vector<256x256xi1>
    %51 = arith.xori %49, %50 : vector<256x256xi1>
    %52 = vector.broadcast %cst : f32 to vector<256x256xf32>
    %53 = arith.select %51, %12, %52 : vector<256x256xi1>, vector<256x256xf32>
    %cst_22 = arith.constant dense<0x7F800000> : vector<256xf32>
    %54 = vector.multi_reduction <minimumf>, %53, %cst_22 [0] : vector<256x256xf32> to vector<256xf32>
    %55 = vector.shape_cast %54 : vector<256xf32> to vector<1x256xf32>
    %cst_23 = arith.constant 5.000000e-01 : f32
    %56 = arith.mulf %cst, %cst_23 : f32
    %57 = vector.broadcast %56 : f32 to vector<1x256xf32>
    %58 = arith.cmpf ogt, %55, %57 : vector<1x256xf32>
    %cst_24 = arith.constant 0.000000e+00 : f32
    %59 = vector.broadcast %cst_24 : f32 to vector<1x256xf32>
    %60 = arith.select %58, %59, %55 : vector<1x256xi1>, vector<1x256xf32>
    %61 = arith.subf %15, %18 : vector<1x256xf32>
    %62 = arith.mulf %61, %61 : vector<1x256xf32>
    %63 = arith.addf %42, %60 : vector<1x256xf32>
    %64 = arith.mulf %62, %63 : vector<1x256xf32>
    %cst_25 = arith.constant dense<0.000000e+00> : vector<1xf32>
    %65 = vector.multi_reduction <add>, %64, %cst_25 [1] : vector<1x256xf32> to vector<1xf32>
    %66 = vector.shape_cast %65 : vector<1xf32> to vector<1x1xf32>
    %67 = arith.index_cast %c0_i32 : i32 to index
    %c0_26 = arith.constant 0 : index
    %68 = vector.load %arg9[%67, %c0_26] : memref<2x1xf32, #tpu.memory_space<vmem>>, vector<1x1xf32>
    tpu.vector_store %arg9[%67, %c0_26], %66 {strides = array<i32>} : memref<2x1xf32, #tpu.memory_space<vmem>>, vector<1x1xf32>,
    %c1_i32 = arith.constant 1 : i32
    %69 = arith.index_cast %c1_i32 : i32 to index
    %c0_27 = arith.constant 0 : index
    %c0_28 = arith.constant 0 : index
    %70 = vector.load %arg1[%69, %c0_27, %c0_28] : memref<2x1x256xf32, #tpu.memory_space<vmem>>, vector<1x1x256xf32>
    %71 = vector.shape_cast %70 : vector<1x1x256xf32> to vector<1x256xf32>
    %72 = arith.index_cast %c1_i32 : i32 to index
    %c0_29 = arith.constant 0 : index
    %c0_30 = arith.constant 0 : index
    %73 = vector.load %arg3[%72, %c0_29, %c0_30] : memref<2x1x256xf32, #tpu.memory_space<vmem>>, vector<1x1x256xf32>
    %74 = vector.shape_cast %73 : vector<1x1x256xf32> to vector<1x256xf32>
    %75 = arith.index_cast %c1_i32 : i32 to index
    %c0_31 = arith.constant 0 : index
    %c0_32 = arith.constant 0 : index
    %76 = vector.load %arg2[%75, %c0_31, %c0_32] : memref<2x256x1xf32, #tpu.memory_space<vmem>>, vector<1x256x1xf32>
    %77 = vector.shape_cast %76 : vector<1x256x1xf32> to vector<256x1xf32>
    %78 = arith.index_cast %c1_i32 : i32 to index
    %c0_33 = arith.constant 0 : index
    %c0_34 = arith.constant 0 : index
    %79 = vector.load %arg4[%78, %c0_33, %c0_34] : memref<2x256x1xf32, #tpu.memory_space<vmem>>, vector<1x256x1xf32>
    %80 = vector.shape_cast %79 : vector<1x256x1xf32> to vector<256x1xf32>
    %cst_35 = arith.constant 5.000000e-01 : f32
    %81 = vector.broadcast %cst_35 : f32 to vector<256x1xf32>
    %82 = arith.cmpf ogt, %77, %81 : vector<256x1xf32>
    %cst_36 = arith.constant 5.000000e-01 : f32
    %83 = vector.broadcast %cst_36 : f32 to vector<1x256xf32>
    %84 = arith.cmpf ogt, %71, %83 : vector<1x256xf32>
    %85 = vector.broadcast %82 : vector<256x1xi1> to vector<256x256xi1>
    %86 = vector.broadcast %84 : vector<1x256xi1> to vector<256x256xi1>
    %87 = vector.broadcast %85 : vector<256x256xi1> to vector<256x256xi1>
    %88 = vector.broadcast %86 : vector<256x256xi1> to vector<256x256xi1>
    %89 = arith.xori %87, %88 : vector<256x256xi1>
    %90 = vector.broadcast %cst : f32 to vector<256x256xf32>
    %91 = arith.select %89, %12, %90 : vector<256x256xi1>, vector<256x256xf32>
    %cst_37 = arith.constant dense<0x7F800000> : vector<256xf32>
    %92 = vector.multi_reduction <minimumf>, %91, %cst_37 [0] : vector<256x256xf32> to vector<256xf32>
    %93 = vector.shape_cast %92 : vector<256xf32> to vector<1x256xf32>
    %cst_38 = arith.constant 5.000000e-01 : f32
    %94 = arith.mulf %cst, %cst_38 : f32
    %95 = vector.broadcast %94 : f32 to vector<1x256xf32>
    %96 = arith.cmpf ogt, %93, %95 : vector<1x256xf32>
    %cst_39 = arith.constant 0.000000e+00 : f32
    %97 = vector.broadcast %cst_39 : f32 to vector<1x256xf32>
    %98 = arith.select %96, %97, %93 : vector<1x256xi1>, vector<1x256xf32>
    %cst_40 = arith.constant 5.000000e-01 : f32
    %99 = vector.broadcast %cst_40 : f32 to vector<256x1xf32>
    %100 = arith.cmpf ogt, %80, %99 : vector<256x1xf32>
    %cst_41 = arith.constant 5.000000e-01 : f32
    %101 = vector.broadcast %cst_41 : f32 to vector<1x256xf32>
    %102 = arith.cmpf ogt, %74, %101 : vector<1x256xf32>
    %103 = vector.broadcast %100 : vector<256x1xi1> to vector<256x256xi1>
    %104 = vector.broadcast %102 : vector<1x256xi1> to vector<256x256xi1>
    %105 = vector.broadcast %103 : vector<256x256xi1> to vector<256x256xi1>
    %106 = vector.broadcast %104 : vector<256x256xi1> to vector<256x256xi1>
    %107 = arith.xori %105, %106 : vector<256x256xi1>
    %108 = vector.broadcast %cst : f32 to vector<256x256xf32>
    %109 = arith.select %107, %12, %108 : vector<256x256xi1>, vector<256x256xf32>
    %cst_42 = arith.constant dense<0x7F800000> : vector<256xf32>
    %110 = vector.multi_reduction <minimumf>, %109, %cst_42 [0] : vector<256x256xf32> to vector<256xf32>
    %111 = vector.shape_cast %110 : vector<256xf32> to vector<1x256xf32>
    %cst_43 = arith.constant 5.000000e-01 : f32
    %112 = arith.mulf %cst, %cst_43 : f32
    %113 = vector.broadcast %112 : f32 to vector<1x256xf32>
    %114 = arith.cmpf ogt, %111, %113 : vector<1x256xf32>
    %cst_44 = arith.constant 0.000000e+00 : f32
    %115 = vector.broadcast %cst_44 : f32 to vector<1x256xf32>
    %116 = arith.select %114, %115, %111 : vector<1x256xi1>, vector<1x256xf32>
    %117 = arith.subf %71, %74 : vector<1x256xf32>
    %118 = arith.mulf %117, %117 : vector<1x256xf32>
    %119 = arith.addf %98, %116 : vector<1x256xf32>
    %120 = arith.mulf %118, %119 : vector<1x256xf32>
    %cst_45 = arith.constant dense<0.000000e+00> : vector<1xf32>
    %121 = vector.multi_reduction <add>, %120, %cst_45 [1] : vector<1x256xf32> to vector<1xf32>
    %122 = vector.shape_cast %121 : vector<1xf32> to vector<1x1xf32>
    %123 = arith.index_cast %c1_i32 : i32 to index
    %c0_46 = arith.constant 0 : index
    %124 = vector.load %arg9[%123, %c0_46] : memref<2x1xf32, #tpu.memory_space<vmem>>, vector<1x1xf32>
    tpu.vector_store %arg9[%123, %c0_46], %122 {strides = array<i32>} : memref<2x1xf32, #tpu.memory_space<vmem>>, vector<1x1xf32>,
    %c2_i32 = arith.constant 2 : i32
    return
  }
  func.func @transform_0(%arg0: i32) -> (i32, i32, i32) {
    %c0_i32 = arith.constant 0 : i32
    %c0_i32_0 = arith.constant 0 : i32
    %c0_i32_1 = arith.constant 0 : i32
    return %arg0, %c0_i32, %c0_i32_0 : i32, i32, i32
  }
  func.func @transform_1(%arg0: i32) -> (i32, i32, i32) {
    %c0_i32 = arith.constant 0 : i32
    %c0_i32_0 = arith.constant 0 : i32
    %c0_i32_1 = arith.constant 0 : i32
    return %arg0, %c0_i32, %c0_i32_0 : i32, i32, i32
  }
  func.func @transform_2(%arg0: i32) -> (i32, i32, i32) {
    %c0_i32 = arith.constant 0 : i32
    %c0_i32_0 = arith.constant 0 : i32
    %c0_i32_1 = arith.constant 0 : i32
    return %arg0, %c0_i32, %c0_i32_0 : i32, i32, i32
  }
  func.func @transform_3(%arg0: i32) -> (i32, i32, i32) {
    %c0_i32 = arith.constant 0 : i32
    %c0_i32_0 = arith.constant 0 : i32
    %c0_i32_1 = arith.constant 0 : i32
    return %arg0, %c0_i32, %c0_i32_0 : i32, i32, i32
  }
  func.func @transform_4(%arg0: i32) -> (i32, i32) {
    %c0_i32 = arith.constant 0 : i32
    %c0_i32_0 = arith.constant 0 : i32
    %c0_i32_1 = arith.constant 0 : i32
    return %c0_i32, %c0_i32_0 : i32, i32
  }
  func.func @transform_5(%arg0: i32) -> (i32, i32) {
    %c0_i32 = arith.constant 0 : i32
    %c0_i32_0 = arith.constant 0 : i32
    %c0_i32_1 = arith.constant 0 : i32
    return %c0_i32, %c0_i32_0 : i32, i32
  }
  func.func @transform_6(%arg0: i32) -> (i32, i32) {
    %c0_i32 = arith.constant 0 : i32
    %c0_i32_0 = arith.constant 0 : i32
    %c0_i32_1 = arith.constant 0 : i32
    return %c0_i32, %c0_i32_0 : i32, i32
  }
  func.func @transform_7(%arg0: i32) -> (i32, i32) {
    %c0_i32 = arith.constant 0 : i32
    %c0_i32_0 = arith.constant 0 : i32
    %c0_i32_1 = arith.constant 0 : i32
    return %c0_i32, %c0_i32_0 : i32, i32
  }
  func.func @transform_8(%arg0: i32) -> (i32, i32) {
    %c0_i32 = arith.constant 0 : i32
    %c0_i32_0 = arith.constant 0 : i32
    return %arg0, %c0_i32 : i32, i32
  }
}

</mosaic_0001>

<llo_original>
// kernel: tpu_custom_call.1
$region0: #{tpu_custom_call.1}
  #allocation0 [shape = 'u32[]', space=smem, size = 0x4, offset = 0x4, fixed_abs, tag = 'smem constant byte address 0x4 - core index']
  #allocation1 [shape = 'u32[144,128]{1,0:T(1,128)}', space=vmem, size = 0x12000, scoped, tag = 'internal scratch']
  %s0 = inlined_call_operand.vmem [shape: f32[2,1,256], index: 0, kind: input, shape index: {}]
  %s1 = inlined_call_operand.vmem [shape: f32[2,256,1], index: 1, kind: input, shape index: {}]
  %s2 = inlined_call_operand.vmem [shape: f32[2,1,256], index: 2, kind: input, shape index: {}]
  %s3 = inlined_call_operand.vmem [shape: f32[2,256,1], index: 3, kind: input, shape index: {}]
  %s4 = inlined_call_operand.vmem [shape: f32[1,256], index: 4, kind: input, shape index: {}]
  %s5 = inlined_call_operand.vmem [shape: f32[1,256], index: 5, kind: input, shape index: {}]
  %s6 = inlined_call_operand.vmem [shape: f32[256,1], index: 6, kind: input, shape index: {}]
  %s7 = inlined_call_operand.vmem [shape: f32[256,1], index: 7, kind: input, shape index: {}]
  %s8 = inlined_call_operand.vmem [shape: f32[2,1], index: 8, kind: output, shape index: {}]
  %s9 = sld [smem:[#allocation0]]
  $region42: #{tpu_custom_call.1} parent=0
    _
  %s11 = ssub.s32 1, %s9
  %s12 = scalar_select 0, %s11, %s9
  // Predicated region
  $region2: #{tpu_custom_call.1} parent=0 // pred_check
    _
  $region3: #{tpu_custom_call.1} parent=0 // pred_check_branch
    %14 = sbr.rel (0) target = $region5
  $region4: #{tpu_custom_call.1} parent=0 // pred_region
    _
  $region5: #{tpu_custom_call.1} parent=0 // pred_fallthru
    _
  // Predicated region
  $region6: #{tpu_custom_call.1} parent=0 // pred_check
    _
  $region7: #{tpu_custom_call.1} parent=0 // pred_check_branch
    %16 = sbr.rel (0) target = $region9
  $region8: #{tpu_custom_call.1} parent=0 // pred_region
    _
  $region9: #{tpu_custom_call.1} parent=0 // pred_fallthru
    _
  // Predicated region
  $region10: #{tpu_custom_call.1} parent=0 // pred_check
    _
  $region11: #{tpu_custom_call.1} parent=0 // pred_check_branch
    %18 = sbr.rel (0) target = $region13
  $region12: #{tpu_custom_call.1} parent=0 // pred_region
    _
  $region13: #{tpu_custom_call.1} parent=0 // pred_fallthru
    _
  // Predicated region
  $region14: #{tpu_custom_call.1} parent=0 // pred_check
    _
  $region15: #{tpu_custom_call.1} parent=0 // pred_check_branch
    %20 = sbr.rel (0) target = $region17
  $region16: #{tpu_custom_call.1} parent=0 // pred_region
    _
  $region17: #{tpu_custom_call.1} parent=0 // pred_fallthru
    _
  // Predicated region
  $region18: #{tpu_custom_call.1} parent=0 // pred_check
    _
  $region19: #{tpu_custom_call.1} parent=0 // pred_check_branch
    %22 = sbr.rel (0) target = $region21
  $region20: #{tpu_custom_call.1} parent=0 // pred_region
    _
  $region21: #{tpu_custom_call.1} parent=0 // pred_fallthru
    _
  // Predicated region
  $region22: #{tpu_custom_call.1} parent=0 // pred_check
    _
  $region23: #{tpu_custom_call.1} parent=0 // pred_check_branch
    %24 = sbr.rel (0) target = $region25
  $region24: #{tpu_custom_call.1} parent=0 // pred_region
    _
  $region25: #{tpu_custom_call.1} parent=0 // pred_fallthru
    _
  // Predicated region
  $region26: #{tpu_custom_call.1} parent=0 // pred_check
    _
  $region27: #{tpu_custom_call.1} parent=0 // pred_check_branch
    %26 = sbr.rel (0) target = $region29
  $region28: #{tpu_custom_call.1} parent=0 // pred_region
    _
  $region29: #{tpu_custom_call.1} parent=0 // pred_fallthru
    _
  // Predicated region
  $region30: #{tpu_custom_call.1} parent=0 // pred_check
    _
  $region31: #{tpu_custom_call.1} parent=0 // pred_check_branch
    %28 = sbr.rel (0) target = $region33
  $region32: #{tpu_custom_call.1} parent=0 // pred_region
    _
  $region33: #{tpu_custom_call.1} parent=0 // pred_fallthru
    _
  %v29 = vld [vmem:[%s6] sm:$0xff]
  %v30 = vld [vmem:[%s6 + $0x8] sm:$0xff]
  %v31 = vld [vmem:[%s6 + $0x10] sm:$0xff]
  %v32 = vld [vmem:[%s6 + $0x18] sm:$0xff]
  %v33 = vld [vmem:[%s6 + $0x20] sm:$0xff]
  %v34 = vld [vmem:[%s6 + $0x28] sm:$0xff]
  %v35 = vld [vmem:[%s6 + $0x30] sm:$0xff]
  %v36 = vld [vmem:[%s6 + $0x38] sm:$0xff]
  %v37 = vld [vmem:[%s6 + $0x40] sm:$0xff]
  %v38 = vld [vmem:[%s6 + $0x48] sm:$0xff]
  %v39 = vld [vmem:[%s6 + $0x50] sm:$0xff]
  %v40 = vld [vmem:[%s6 + $0x58] sm:$0xff]
  %v41 = vld [vmem:[%s6 + $0x60] sm:$0xff]
  %v42 = vld [vmem:[%s6 + $0x68] sm:$0xff]
  %v43 = vld [vmem:[%s6 + $0x70] sm:$0xff]
  %v44 = vld [vmem:[%s6 + $0x78] sm:$0xff]
  %v45 = vld [vmem:[%s6 + $0x80] sm:$0xff]
  %v46 = vld [vmem:[%s6 + $0x88] sm:$0xff]
  %v47 = vld [vmem:[%s6 + $0x90] sm:$0xff]
  %v48 = vld [vmem:[%s6 + $0x98] sm:$0xff]
  %v49 = vld [vmem:[%s6 + $0xa0] sm:$0xff]
  %v50 = vld [vmem:[%s6 + $0xa8] sm:$0xff]
  %v51 = vld [vmem:[%s6 + $0xb0] sm:$0xff]
  %v52 = vld [vmem:[%s6 + $0xb8] sm:$0xff]
  %v53 = vld [vmem:[%s6 + $0xc0] sm:$0xff]
  %v54 = vld [vmem:[%s6 + $0xc8] sm:$0xff]
  %v55 = vld [vmem:[%s6 + $0xd0] sm:$0xff]
  %v56 = vld [vmem:[%s6 + $0xd8] sm:$0xff]
  %v57 = vld [vmem:[%s6 + $0xe0] sm:$0xff]
  %v58 = vld [vmem:[%s6 + $0xe8] sm:$0xff]
  %v59 = vld [vmem:[%s6 + $0xf0] sm:$0xff]
  %v60 = vld [vmem:[%s6 + $0xf8] sm:$0xff]
  %v61 = vld [vmem:[%s4] sm:$0x3]
  %63 = vset.pattern.permute.xlu0 0
  %64 = vperm.xlu0 %63, %v29
  %v65 = vpop.permute.xlu0 %64
  %68 = vset.pattern.permute.xlu0 0
  %69 = vperm.xlu0 %68, %v30
  %v70 = vpop.permute.xlu0 %69
  %73 = vset.pattern.permute.xlu0 0
  %74 = vperm.xlu0 %73, %v31
  %v75 = vpop.permute.xlu0 %74
  %78 = vset.pattern.permute.xlu0 0
  %79 = vperm.xlu0 %78, %v32
  %v80 = vpop.permute.xlu0 %79
  %83 = vset.pattern.permute.xlu0 0
  %84 = vperm.xlu0 %83, %v33
  %v85 = vpop.permute.xlu0 %84
  %88 = vset.pattern.permute.xlu0 0
  %89 = vperm.xlu0 %88, %v34
  %v90 = vpop.permute.xlu0 %89
  %93 = vset.pattern.permute.xlu0 0
  %94 = vperm.xlu0 %93, %v35
  %v95 = vpop.permute.xlu0 %94
  %98 = vset.pattern.permute.xlu0 0
  %99 = vperm.xlu0 %98, %v36
  %v100 = vpop.permute.xlu0 %99
  %103 = vset.pattern.permute.xlu0 0
  %104 = vperm.xlu0 %103, %v37
  %v105 = vpop.permute.xlu0 %104
  %108 = vset.pattern.permute.xlu0 0
  %109 = vperm.xlu0 %108, %v38
  %v110 = vpop.permute.xlu0 %109
  %113 = vset.pattern.permute.xlu0 0
  %114 = vperm.xlu0 %113, %v39
  %v115 = vpop.permute.xlu0 %114
  %118 = vset.pattern.permute.xlu0 0
  %119 = vperm.xlu0 %118, %v40
  %v120 = vpop.permute.xlu0 %119
  %123 = vset.pattern.permute.xlu0 0
  %124 = vperm.xlu0 %123, %v41
  %v125 = vpop.permute.xlu0 %124
  %128 = vset.pattern.permute.xlu0 0
  %129 = vperm.xlu0 %128, %v42
  %v130 = vpop.permute.xlu0 %129
  %133 = vset.pattern.permute.xlu0 0
  %134 = vperm.xlu0 %133, %v43
  %v135 = vpop.permute.xlu0 %134
  %138 = vset.pattern.permute.xlu0 0
  %139 = vperm.xlu0 %138, %v44
  %v140 = vpop.permute.xlu0 %139
  %143 = vset.pattern.permute.xlu0 0
  %144 = vperm.xlu0 %143, %v45
  %v145 = vpop.permute.xlu0 %144
  %148 = vset.pattern.permute.xlu0 0
  %149 = vperm.xlu0 %148, %v46
  %v150 = vpop.permute.xlu0 %149
  %153 = vset.pattern.permute.xlu0 0
  %154 = vperm.xlu0 %153, %v47
  %v155 = vpop.permute.xlu0 %154
  %158 = vset.pattern.permute.xlu0 0
  %159 = vperm.xlu0 %158, %v48
  %v160 = vpop.permute.xlu0 %159
  %163 = vset.pattern.permute.xlu0 0
  %164 = vperm.xlu0 %163, %v49
  %v165 = vpop.permute.xlu0 %164
  %168 = vset.pattern.permute.xlu0 0
  %169 = vperm.xlu0 %168, %v50
  %v170 = vpop.permute.xlu0 %169
  %173 = vset.pattern.permute.xlu0 0
  %174 = vperm.xlu0 %173, %v51
  %v175 = vpop.permute.xlu0 %174
  %178 = vset.pattern.permute.xlu0 0
  %179 = vperm.xlu0 %178, %v52
  %v180 = vpop.permute.xlu0 %179
  %183 = vset.pattern.permute.xlu0 0
  %184 = vperm.xlu0 %183, %v53
  %v185 = vpop.permute.xlu0 %184
  %188 = vset.pattern.permute.xlu0 0
  %189 = vperm.xlu0 %188, %v54
  %v190 = vpop.permute.xlu0 %189
  %193 = vset.pattern.permute.xlu0 0
  %194 = vperm.xlu0 %193, %v55
  %v195 = vpop.permute.xlu0 %194
  %198 = vset.pattern.permute.xlu0 0
  %199 = vperm.xlu0 %198, %v56
  %v200 = vpop.permute.xlu0 %199
  %203 = vset.pattern.permute.xlu0 0
  %204 = vperm.xlu0 %203, %v57
  %v205 = vpop.permute.xlu0 %204
  %208 = vset.pattern.permute.xlu0 0
  %209 = vperm.xlu0 %208, %v58
  %v210 = vpop.permute.xlu0 %209
  %213 = vset.pattern.permute.xlu0 0
  %214 = vperm.xlu0 %213, %v59
  %v215 = vpop.permute.xlu0 %214
  %218 = vset.pattern.permute.xlu0 0
  %219 = vperm.xlu0 %218, %v60
  %v220 = vpop.permute.xlu0 %219
  %v223 = vlaneseq
  %v224 = vshrl.u32 %v223, 7
  %v225 = vsub.s32 0, %v224
  %v226 = vrot.slane %v61, %v225
  %v227 = vlaneseq
  %v228 = vshrl.u32 %v227, 7
  %v229 = vsub.s32 1, %v228
  %v230 = vrot.slane %v61, %v229
  %v233 = vsub.f32 %v65, %v226
  %v234 = vsub.f32 %v65, %v230
  %v235 = vsub.f32 %v70, %v226
  %v236 = vsub.f32 %v70, %v230
  %v237 = vsub.f32 %v75, %v226
  %v238 = vsub.f32 %v75, %v230
  %v239 = vsub.f32 %v80, %v226
  %v240 = vsub.f32 %v80, %v230
  %v241 = vsub.f32 %v85, %v226
  %v242 = vsub.f32 %v85, %v230
  %v243 = vsub.f32 %v90, %v226
  %v244 = vsub.f32 %v90, %v230
  %v245 = vsub.f32 %v95, %v226
  %v246 = vsub.f32 %v95, %v230
  %v247 = vsub.f32 %v100, %v226
  %v248 = vsub.f32 %v100, %v230
  %v249 = vsub.f32 %v105, %v226
  %v250 = vsub.f32 %v105, %v230
  %v251 = vsub.f32 %v110, %v226
  %v252 = vsub.f32 %v110, %v230
  %v253 = vsub.f32 %v115, %v226
  %v254 = vsub.f32 %v115, %v230
  %v255 = vsub.f32 %v120, %v226
  %v256 = vsub.f32 %v120, %v230
  %v257 = vsub.f32 %v125, %v226
  %v258 = vsub.f32 %v125, %v230
  %v259 = vsub.f32 %v130, %v226
  %v260 = vsub.f32 %v130, %v230
  %v261 = vsub.f32 %v135, %v226
  %v262 = vsub.f32 %v135, %v230
  %v263 = vsub.f32 %v140, %v226
  %v264 = vsub.f32 %v140, %v230
  %v265 = vsub.f32 %v145, %v226
  %v266 = vsub.f32 %v145, %v230
  %v267 = vsub.f32 %v150, %v226
  %v268 = vsub.f32 %v150, %v230
  %v269 = vsub.f32 %v155, %v226
  %v270 = vsub.f32 %v155, %v230
  %v271 = vsub.f32 %v160, %v226
  %v272 = vsub.f32 %v160, %v230
  %v273 = vsub.f32 %v165, %v226
  %v274 = vsub.f32 %v165, %v230
  %v275 = vsub.f32 %v170, %v226
  %v276 = vsub.f32 %v170, %v230
  %v277 = vsub.f32 %v175, %v226
  %v278 = vsub.f32 %v175, %v230
  %v279 = vsub.f32 %v180, %v226
  %v280 = vsub.f32 %v180, %v230
  %v281 = vsub.f32 %v185, %v226
  %v282 = vsub.f32 %v185, %v230
  %v283 = vsub.f32 %v190, %v226
  %v284 = vsub.f32 %v190, %v230
  %v285 = vsub.f32 %v195, %v226
  %v286 = vsub.f32 %v195, %v230
  %v287 = vsub.f32 %v200, %v226
  %v288 = vsub.f32 %v200, %v230
  %v289 = vsub.f32 %v205, %v226
  %v290 = vsub.f32 %v205, %v230
  %v291 = vsub.f32 %v210, %v226
  %v292 = vsub.f32 %v210, %v230
  %v293 = vsub.f32 %v215, %v226
  %v294 = vsub.f32 %v215, %v230
  %v295 = vsub.f32 %v220, %v226
  %v296 = vsub.f32 %v220, %v230
  %v297 = vld [vmem:[%s7] sm:$0xff]
  %v298 = vld [vmem:[%s7 + $0x8] sm:$0xff]
  %v299 = vld [vmem:[%s7 + $0x10] sm:$0xff]
  %v300 = vld [vmem:[%s7 + $0x18] sm:$0xff]
  %v301 = vld [vmem:[%s7 + $0x20] sm:$0xff]
  %v302 = vld [vmem:[%s7 + $0x28] sm:$0xff]
  %v303 = vld [vmem:[%s7 + $0x30] sm:$0xff]
  %v304 = vld [vmem:[%s7 + $0x38] sm:$0xff]
  %v305 = vld [vmem:[%s7 + $0x40] sm:$0xff]
  %v306 = vld [vmem:[%s7 + $0x48] sm:$0xff]
  %v307 = vld [vmem:[%s7 + $0x50] sm:$0xff]
  %v308 = vld [vmem:[%s7 + $0x58] sm:$0xff]
  %v309 = vld [vmem:[%s7 + $0x60] sm:$0xff]
  %v310 = vld [vmem:[%s7 + $0x68] sm:$0xff]
  %v311 = vld [vmem:[%s7 + $0x70] sm:$0xff]
  %v312 = vld [vmem:[%s7 + $0x78] sm:$0xff]
  %v313 = vld [vmem:[%s7 + $0x80] sm:$0xff]
  %v314 = vld [vmem:[%s7 + $0x88] sm:$0xff]
  %v315 = vld [vmem:[%s7 + $0x90] sm:$0xff]
  %v316 = vld [vmem:[%s7 + $0x98] sm:$0xff]
  %v317 = vld [vmem:[%s7 + $0xa0] sm:$0xff]
  %v318 = vld [vmem:[%s7 + $0xa8] sm:$0xff]
  %v319 = vld [vmem:[%s7 + $0xb0] sm:$0xff]
  %v320 = vld [vmem:[%s7 + $0xb8] sm:$0xff]
  %v321 = vld [vmem:[%s7 + $0xc0] sm:$0xff]
  %v322 = vld [vmem:[%s7 + $0xc8] sm:$0xff]
  %v323 = vld [vmem:[%s7 + $0xd0] sm:$0xff]
  %v324 = vld [vmem:[%s7 + $0xd8] sm:$0xff]
  %v325 = vld [vmem:[%s7 + $0xe0] sm:$0xff]
  %v326 = vld [vmem:[%s7 + $0xe8] sm:$0xff]
  %v327 = vld [vmem:[%s7 + $0xf0] sm:$0xff]
  %v328 = vld [vmem:[%s7 + $0xf8] sm:$0xff]
  %v329 = vld [vmem:[%s5] sm:$0x3]
  %331 = vset.pattern.permute.xlu0 0
  %332 = vperm.xlu0 %331, %v297
  %v333 = vpop.permute.xlu0 %332
  %336 = vset.pattern.permute.xlu0 0
  %337 = vperm.xlu0 %336, %v298
  %v338 = vpop.permute.xlu0 %337
  %341 = vset.pattern.permute.xlu0 0
  %342 = vperm.xlu0 %341, %v299
  %v343 = vpop.permute.xlu0 %342
  %346 = vset.pattern.permute.xlu0 0
  %347 = vperm.xlu0 %346, %v300
  %v348 = vpop.permute.xlu0 %347
  %351 = vset.pattern.permute.xlu0 0
  %352 = vperm.xlu0 %351, %v301
  %v353 = vpop.permute.xlu0 %352
  %356 = vset.pattern.permute.xlu0 0
  %357 = vperm.xlu0 %356, %v302
  %v358 = vpop.permute.xlu0 %357
  %361 = vset.pattern.permute.xlu0 0
  %362 = vperm.xlu0 %361, %v303
  %v363 = vpop.permute.xlu0 %362
  %366 = vset.pattern.permute.xlu0 0
  %367 = vperm.xlu0 %366, %v304
  %v368 = vpop.permute.xlu0 %367
  %371 = vset.pattern.permute.xlu0 0
  %372 = vperm.xlu0 %371, %v305
  %v373 = vpop.permute.xlu0 %372
  %376 = vset.pattern.permute.xlu0 0
  %377 = vperm.xlu0 %376, %v306
  %v378 = vpop.permute.xlu0 %377
  %381 = vset.pattern.permute.xlu0 0
  %382 = vperm.xlu0 %381, %v307
  %v383 = vpop.permute.xlu0 %382
  %386 = vset.pattern.permute.xlu0 0
  %387 = vperm.xlu0 %386, %v308
  %v388 = vpop.permute.xlu0 %387
  %391 = vset.pattern.permute.xlu0 0
  %392 = vperm.xlu0 %391, %v309
  %v393 = vpop.permute.xlu0 %392
  %396 = vset.pattern.permute.xlu0 0
  %397 = vperm.xlu0 %396, %v310
  %v398 = vpop.permute.xlu0 %397
  %401 = vset.pattern.permute.xlu0 0
  %402 = vperm.xlu0 %401, %v311
  %v403 = vpop.permute.xlu0 %402
  %406 = vset.pattern.permute.xlu0 0
  %407 = vperm.xlu0 %406, %v312
  %v408 = vpop.permute.xlu0 %407
  %411 = vset.pattern.permute.xlu0 0
  %412 = vperm.xlu0 %411, %v313
  %v413 = vpop.permute.xlu0 %412
  %416 = vset.pattern.permute.xlu0 0
  %417 = vperm.xlu0 %416, %v314
  %v418 = vpop.permute.xlu0 %417
  %421 = vset.pattern.permute.xlu0 0
  %422 = vperm.xlu0 %421, %v315
  %v423 = vpop.permute.xlu0 %422
  %426 = vset.pattern.permute.xlu0 0
  %427 = vperm.xlu0 %426, %v316
  %v428 = vpop.permute.xlu0 %427
  %431 = vset.pattern.permute.xlu0 0
  %432 = vperm.xlu0 %431, %v317
  %v433 = vpop.permute.xlu0 %432
  %436 = vset.pattern.permute.xlu0 0
  %437 = vperm.xlu0 %436, %v318
  %v438 = vpop.permute.xlu0 %437
  %441 = vset.pattern.permute.xlu0 0
  %442 = vperm.xlu0 %441, %v319
  %v443 = vpop.permute.xlu0 %442
  %446 = vset.pattern.permute.xlu0 0
  %447 = vperm.xlu0 %446, %v320
  %v448 = vpop.permute.xlu0 %447
  %451 = vset.pattern.permute.xlu0 0
  %452 = vperm.xlu0 %451, %v321
  %v453 = vpop.permute.xlu0 %452
  %456 = vset.pattern.permute.xlu0 0
  %457 = vperm.xlu0 %456, %v322
  %v458 = vpop.permute.xlu0 %457
  %461 = vset.pattern.permute.xlu0 0
  %462 = vperm.xlu0 %461, %v323
  %v463 = vpop.permute.xlu0 %462
  %466 = vset.pattern.permute.xlu0 0
  %467 = vperm.xlu0 %466, %v324
  %v468 = vpop.permute.xlu0 %467
  %471 = vset.pattern.permute.xlu0 0
  %472 = vperm.xlu0 %471, %v325
  %v473 = vpop.permute.xlu0 %472
  %476 = vset.pattern.permute.xlu0 0
  %477 = vperm.xlu0 %476, %v326
  %v478 = vpop.permute.xlu0 %477
  %481 = vset.pattern.permute.xlu0 0
  %482 = vperm.xlu0 %481, %v327
  %v483 = vpop.permute.xlu0 %482
  %486 = vset.pattern.permute.xlu0 0
  %487 = vperm.xlu0 %486, %v328
  %v488 = vpop.permute.xlu0 %487
  %v491 = vlaneseq
  %v492 = vshrl.u32 %v491, 7
  %v493 = vsub.s32 0, %v492
  %v494 = vrot.slane %v329, %v493
  %v495 = vlaneseq
  %v496 = vshrl.u32 %v495, 7
  %v497 = vsub.s32 1, %v496
  %v498 = vrot.slane %v329, %v497
  %v501 = vsub.f32 %v333, %v494
  %v502 = vsub.f32 %v333, %v498
  %v503 = vsub.f32 %v338, %v494
  %v504 = vsub.f32 %v338, %v498
  %v505 = vsub.f32 %v343, %v494
  %v506 = vsub.f32 %v343, %v498
  %v507 = vsub.f32 %v348, %v494
  %v508 = vsub.f32 %v348, %v498
  %v509 = vsub.f32 %v353, %v494
  %v510 = vsub.f32 %v353, %v498
  %v511 = vsub.f32 %v358, %v494
  %v512 = vsub.f32 %v358, %v498
  %v513 = vsub.f32 %v363, %v494
  %v514 = vsub.f32 %v363, %v498
  %v515 = vsub.f32 %v368, %v494
  %v516 = vsub.f32 %v368, %v498
  %v517 = vsub.f32 %v373, %v494
  %v518 = vsub.f32 %v373, %v498
  %v519 = vsub.f32 %v378, %v494
  %v520 = vsub.f32 %v378, %v498
  %v521 = vsub.f32 %v383, %v494
  %v522 = vsub.f32 %v383, %v498
  %v523 = vsub.f32 %v388, %v494
  %v524 = vsub.f32 %v388, %v498
  %v525 = vsub.f32 %v393, %v494
  %v526 = vsub.f32 %v393, %v498
  %v527 = vsub.f32 %v398, %v494
  %v528 = vsub.f32 %v398, %v498
  %v529 = vsub.f32 %v403, %v494
  %v530 = vsub.f32 %v403, %v498
  %v531 = vsub.f32 %v408, %v494
  %v532 = vsub.f32 %v408, %v498
  %v533 = vsub.f32 %v413, %v494
  %v534 = vsub.f32 %v413, %v498
  %v535 = vsub.f32 %v418, %v494
  %v536 = vsub.f32 %v418, %v498
  %v537 = vsub.f32 %v423, %v494
  %v538 = vsub.f32 %v423, %v498
  %v539 = vsub.f32 %v428, %v494
  %v540 = vsub.f32 %v428, %v498
  %v541 = vsub.f32 %v433, %v494
  %v542 = vsub.f32 %v433, %v498
  %v543 = vsub.f32 %v438, %v494
  %v544 = vsub.f32 %v438, %v498
  %v545 = vsub.f32 %v443, %v494
  %v546 = vsub.f32 %v443, %v498
  %v547 = vsub.f32 %v448, %v494
  %v548 = vsub.f32 %v448, %v498
  %v549 = vsub.f32 %v453, %v494
  %v550 = vsub.f32 %v453, %v498
  %v551 = vsub.f32 %v458, %v494
  %v552 = vsub.f32 %v458, %v498
  %v553 = vsub.f32 %v463, %v494
  %v554 = vsub.f32 %v463, %v498
  %v555 = vsub.f32 %v468, %v494
  %v556 = vsub.f32 %v468, %v498
  %v557 = vsub.f32 %v473, %v494
  %v558 = vsub.f32 %v473, %v498
  %v559 = vsub.f32 %v478, %v494
  %v560 = vsub.f32 %v478, %v498
  %v561 = vsub.f32 %v483, %v494
  %v562 = vsub.f32 %v483, %v498
  %v563 = vsub.f32 %v488, %v494
  %v564 = vsub.f32 %v488, %v498
  %v565 = vmul.f32 %v233, %v233
  %v566 = vmul.f32 %v234, %v234
  %v567 = vmul.f32 %v235, %v235
  %v568 = vmul.f32 %v236, %v236
  %v569 = vmul.f32 %v237, %v237
  %v570 = vmul.f32 %v238, %v238
  %v571 = vmul.f32 %v239, %v239
  %v572 = vmul.f32 %v240, %v240
  %v573 = vmul.f32 %v241, %v241
  %v574 = vmul.f32 %v242, %v242
  %v575 = vmul.f32 %v243, %v243
  %v576 = vmul.f32 %v244, %v244
  %v577 = vmul.f32 %v245, %v245
  %v578 = vmul.f32 %v246, %v246
  %v579 = vmul.f32 %v247, %v247
  %v580 = vmul.f32 %v248, %v248
  %v581 = vmul.f32 %v249, %v249
  %v582 = vmul.f32 %v250, %v250
  %v583 = vmul.f32 %v251, %v251
  %v584 = vmul.f32 %v252, %v252
  %v585 = vmul.f32 %v253, %v253
  %v586 = vmul.f32 %v254, %v254
  %v587 = vmul.f32 %v255, %v255
  %v588 = vmul.f32 %v256, %v256
  %v589 = vmul.f32 %v257, %v257
  %v590 = vmul.f32 %v258, %v258
  %v591 = vmul.f32 %v259, %v259
  %v592 = vmul.f32 %v260, %v260
  %v593 = vmul.f32 %v261, %v261
  %v594 = vmul.f32 %v262, %v262
  %v595 = vmul.f32 %v263, %v263
  %v596 = vmul.f32 %v264, %v264
  %v597 = vmul.f32 %v265, %v265
  %v598 = vmul.f32 %v266, %v266
  %v599 = vmul.f32 %v267, %v267
  %v600 = vmul.f32 %v268, %v268
  %v601 = vmul.f32 %v269, %v269
  %v602 = vmul.f32 %v270, %v270
  %v603 = vmul.f32 %v271, %v271
  %v604 = vmul.f32 %v272, %v272
  %v605 = vmul.f32 %v273, %v273
  %v606 = vmul.f32 %v274, %v274
  %v607 = vmul.f32 %v275, %v275
  %v608 = vmul.f32 %v276, %v276
  %v609 = vmul.f32 %v277, %v277
  %v610 = vmul.f32 %v278, %v278
  %v611 = vmul.f32 %v279, %v279
  %v612 = vmul.f32 %v280, %v280
  %v613 = vmul.f32 %v281, %v281
  %v614 = vmul.f32 %v282, %v282
  %v615 = vmul.f32 %v283, %v283
  %v616 = vmul.f32 %v284, %v284
  %v617 = vmul.f32 %v285, %v285
  %v618 = vmul.f32 %v286, %v286
  %v619 = vmul.f32 %v287, %v287
  %v620 = vmul.f32 %v288, %v288
  %v621 = vmul.f32 %v289, %v289
  %v622 = vmul.f32 %v290, %v290
  %v623 = vmul.f32 %v291, %v291
  %v624 = vmul.f32 %v292, %v292
  %v625 = vmul.f32 %v293, %v293
  %v626 = vmul.f32 %v294, %v294
  %v627 = vmul.f32 %v295, %v295
  %v628 = vmul.f32 %v296, %v296
  %v629 = vmul.f32 %v501, %v501
  %v630 = vmul.f32 %v502, %v502
  %v631 = vmul.f32 %v503, %v503
  %v632 = vmul.f32 %v504, %v504
  %v633 = vmul.f32 %v505, %v505
  %v634 = vmul.f32 %v506, %v506
  %v635 = vmul.f32 %v507, %v507
  %v636 = vmul.f32 %v508, %v508
  %v637 = vmul.f32 %v509, %v509
  %v638 = vmul.f32 %v510, %v510
  %v639 = vmul.f32 %v511, %v511
  %v640 = vmul.f32 %v512, %v512
  %v641 = vmul.f32 %v513, %v513
  %v642 = vmul.f32 %v514, %v514
  %v643 = vmul.f32 %v515, %v515
  %v644 = vmul.f32 %v516, %v516
  %v645 = vmul.f32 %v517, %v517
  %v646 = vmul.f32 %v518, %v518
  %v647 = vmul.f32 %v519, %v519
  %v648 = vmul.f32 %v520, %v520
  %v649 = vmul.f32 %v521, %v521
  %v650 = vmul.f32 %v522, %v522
  %v651 = vmul.f32 %v523, %v523
  %v652 = vmul.f32 %v524, %v524
  %v653 = vmul.f32 %v525, %v525
  %v654 = vmul.f32 %v526, %v526
  %v655 = vmul.f32 %v527, %v527
  %v656 = vmul.f32 %v528, %v528
  %v657 = vmul.f32 %v529, %v529
  %v658 = vmul.f32 %v530, %v530
  %v659 = vmul.f32 %v531, %v531
  %v660 = vmul.f32 %v532, %v532
  %v661 = vmul.f32 %v533, %v533
  %v662 = vmul.f32 %v534, %v534
  %v663 = vmul.f32 %v535, %v535
  %v664 = vmul.f32 %v536, %v536
  %v665 = vmul.f32 %v537, %v537
  %v666 = vmul.f32 %v538, %v538
  %v667 = vmul.f32 %v539, %v539
  %v668 = vmul.f32 %v540, %v540
  %v669 = vmul.f32 %v541, %v541
  %v670 = vmul.f32 %v542, %v542
  %v671 = vmul.f32 %v543, %v543
  %v672 = vmul.f32 %v544, %v544
  %v673 = vmul.f32 %v545, %v545
  %v674 = vmul.f32 %v546, %v546
  %v675 = vmul.f32 %v547, %v547
  %v676 = vmul.f32 %v548, %v548
  %v677 = vmul.f32 %v549, %v549
  %v678 = vmul.f32 %v550, %v550
  %v679 = vmul.f32 %v551, %v551
  %v680 = vmul.f32 %v552, %v552
  %v681 = vmul.f32 %v553, %v553
  %v682 = vmul.f32 %v554, %v554
  %v683 = vmul.f32 %v555, %v555
  %v684 = vmul.f32 %v556, %v556
  %v685 = vmul.f32 %v557, %v557
  %v686 = vmul.f32 %v558, %v558
  %v687 = vmul.f32 %v559, %v559
  %v688 = vmul.f32 %v560, %v560
  %v689 = vmul.f32 %v561, %v561
  %v690 = vmul.f32 %v562, %v562
  %v691 = vmul.f32 %v563, %v563
  %v692 = vmul.f32 %v564, %v564
  %v693 = vadd.f32 %v565, %v629
  %v694 = vadd.f32 %v566, %v630
  %v695 = vadd.f32 %v567, %v631
  %v696 = vadd.f32 %v568, %v632
  %v697 = vadd.f32 %v569, %v633
  %v698 = vadd.f32 %v570, %v634
  %v699 = vadd.f32 %v571, %v635
  %v700 = vadd.f32 %v572, %v636
  %v701 = vadd.f32 %v573, %v637
  %v702 = vadd.f32 %v574, %v638
  %v703 = vadd.f32 %v575, %v639
  %v704 = vadd.f32 %v576, %v640
  %v705 = vadd.f32 %v577, %v641
  %v706 = vadd.f32 %v578, %v642
  %v707 = vadd.f32 %v579, %v643
  %v708 = vadd.f32 %v580, %v644
  %v709 = vadd.f32 %v581, %v645
  %v710 = vadd.f32 %v582, %v646
  %v711 = vadd.f32 %v583, %v647
  %v712 = vadd.f32 %v584, %v648
  %v713 = vadd.f32 %v585, %v649
  %v714 = vadd.f32 %v586, %v650
  %v715 = vadd.f32 %v587, %v651
  %v716 = vadd.f32 %v588, %v652
  %v717 = vadd.f32 %v589, %v653
  %v718 = vadd.f32 %v590, %v654
  %v719 = vadd.f32 %v591, %v655
  %v720 = vadd.f32 %v592, %v656
  %v721 = vadd.f32 %v593, %v657
  %v722 = vadd.f32 %v594, %v658
  %v723 = vadd.f32 %v595, %v659
  %v724 = vadd.f32 %v596, %v660
  %v725 = vadd.f32 %v597, %v661
  %v726 = vadd.f32 %v598, %v662
  %v727 = vadd.f32 %v599, %v663
  %v728 = vadd.f32 %v600, %v664
  %v729 = vadd.f32 %v601, %v665
  %v730 = vadd.f32 %v602, %v666
  %v731 = vadd.f32 %v603, %v667
  %v732 = vadd.f32 %v604, %v668
  %v733 = vadd.f32 %v605, %v669
  %v734 = vadd.f32 %v606, %v670
  %v735 = vadd.f32 %v607, %v671
  %v736 = vadd.f32 %v608, %v672
  %v737 = vadd.f32 %v609, %v673
  %v738 = vadd.f32 %v610, %v674
  %v739 = vadd.f32 %v611, %v675
  %v740 = vadd.f32 %v612, %v676
  %v741 = vadd.f32 %v613, %v677
  %v742 = vadd.f32 %v614, %v678
  %v743 = vadd.f32 %v615, %v679
  %v744 = vadd.f32 %v616, %v680
  %v745 = vadd.f32 %v617, %v681
  %v746 = vadd.f32 %v618, %v682
  %v747 = vadd.f32 %v619, %v683
  %v748 = vadd.f32 %v620, %v684
  %v749 = vadd.f32 %v621, %v685
  %v750 = vadd.f32 %v622, %v686
  %v751 = vadd.f32 %v623, %v687
  %v752 = vadd.f32 %v624, %v688
  %v753 = vadd.f32 %v625, %v689
  %v754 = vadd.f32 %v626, %v690
  %v755 = vadd.f32 %v627, %v691
  %v756 = vadd.f32 %v628, %v692
  %v757 = vld [vmem:[%s0] sm:$0x3]
  %v758 = vld [vmem:[%s2] sm:$0x3]
  %v759 = vld [vmem:[%s1] sm:$0xff]
  %v760 = vld [vmem:[%s1 + $0x8] sm:$0xff]
  %v761 = vld [vmem:[%s1 + $0x10] sm:$0xff]
  %v762 = vld [vmem:[%s1 + $0x18] sm:$0xff]
  %v763 = vld [vmem:[%s1 + $0x20] sm:$0xff]
  %v764 = vld [vmem:[%s1 + $0x28] sm:$0xff]
  %v765 = vld [vmem:[%s1 + $0x30] sm:$0xff]
  %v766 = vld [vmem:[%s1 + $0x38] sm:$0xff]
  %v767 = vld [vmem:[%s1 + $0x40] sm:$0xff]
  %v768 = vld [vmem:[%s1 + $0x48] sm:$0xff]
  %v769 = vld [vmem:[%s1 + $0x50] sm:$0xff]
  %v770 = vld [vmem:[%s1 + $0x58] sm:$0xff]
  %v771 = vld [vmem:[%s1 + $0x60] sm:$0xff]
  %v772 = vld [vmem:[%s1 + $0x68] sm:$0xff]
  %v773 = vld [vmem:[%s1 + $0x70] sm:$0xff]
  %v774 = vld [vmem:[%s1 + $0x78] sm:$0xff]
  %v775 = vld [vmem:[%s1 + $0x80] sm:$0xff]
  %v776 = vld [vmem:[%s1 + $0x88] sm:$0xff]
  %v777 = vld [vmem:[%s1 + $0x90] sm:$0xff]
  %v778 = vld [vmem:[%s1 + $0x98] sm:$0xff]
  %v779 = vld [vmem:[%s1 + $0xa0] sm:$0xff]
  %v780 = vld [vmem:[%s1 + $0xa8] sm:$0xff]
  %v781 = vld [vmem:[%s1 + $0xb0] sm:$0xff]
  %v782 = vld [vmem:[%s1 + $0xb8] sm:$0xff]
  %v783 = vld [vmem:[%s1 + $0xc0] sm:$0xff]
  %v784 = vld [vmem:[%s1 + $0xc8] sm:$0xff]
  %v785 = vld [vmem:[%s1 + $0xd0] sm:$0xff]
  %v786 = vld [vmem:[%s1 + $0xd8] sm:$0xff]
  %v787 = vld [vmem:[%s1 + $0xe0] sm:$0xff]
  %v788 = vld [vmem:[%s1 + $0xe8] sm:$0xff]
  %v789 = vld [vmem:[%s1 + $0xf0] sm:$0xff]
  %v790 = vld [vmem:[%s1 + $0xf8] sm:$0xff]
  %v791 = vld [vmem:[%s3] sm:$0xff]
  %v792 = vld [vmem:[%s3 + $0x8] sm:$0xff]
  %v793 = vld [vmem:[%s3 + $0x10] sm:$0xff]
  %v794 = vld [vmem:[%s3 + $0x18] sm:$0xff]
  %v795 = vld [vmem:[%s3 + $0x20] sm:$0xff]
  %v796 = vld [vmem:[%s3 + $0x28] sm:$0xff]
  %v797 = vld [vmem:[%s3 + $0x30] sm:$0xff]
  %v798 = vld [vmem:[%s3 + $0x38] sm:$0xff]
  %v799 = vld [vmem:[%s3 + $0x40] sm:$0xff]
  %v800 = vld [vmem:[%s3 + $0x48] sm:$0xff]
  %v801 = vld [vmem:[%s3 + $0x50] sm:$0xff]
  %v802 = vld [vmem:[%s3 + $0x58] sm:$0xff]
  %v803 = vld [vmem:[%s3 + $0x60] sm:$0xff]
  %v804 = vld [vmem:[%s3 + $0x68] sm:$0xff]
  %v805 = vld [vmem:[%s3 + $0x70] sm:$0xff]
  %v806 = vld [vmem:[%s3 + $0x78] sm:$0xff]
  %v807 = vld [vmem:[%s3 + $0x80] sm:$0xff]
  %v808 = vld [vmem:[%s3 + $0x88] sm:$0xff]
  %v809 = vld [vmem:[%s3 + $0x90] sm:$0xff]
  %v810 = vld [vmem:[%s3 + $0x98] sm:$0xff]
  %v811 = vld [vmem:[%s3 + $0xa0] sm:$0xff]
  %v812 = vld [vmem:[%s3 + $0xa8] sm:$0xff]
  %v813 = vld [vmem:[%s3 + $0xb0] sm:$0xff]
  %v814 = vld [vmem:[%s3 + $0xb8] sm:$0xff]
  %v815 = vld [vmem:[%s3 + $0xc0] sm:$0xff]
  %v816 = vld [vmem:[%s3 + $0xc8] sm:$0xff]
  %v817 = vld [vmem:[%s3 + $0xd0] sm:$0xff]
  %v818 = vld [vmem:[%s3 + $0xd8] sm:$0xff]
  %v819 = vld [vmem:[%s3 + $0xe0] sm:$0xff]
  %v820 = vld [vmem:[%s3 + $0xe8] sm:$0xff]
  %v821 = vld [vmem:[%s3 + $0xf0] sm:$0xff]
  %v822 = vld [vmem:[%s3 + $0xf8] sm:$0xff]
  %vm823 = vcmp.gt.f32.partialorder %v759, 0.5
  %vm824 = vcmp.gt.f32.partialorder %v760, 0.5
  %vm825 = vcmp.gt.f32.partialorder %v761, 0.5
  %vm826 = vcmp.gt.f32.partialorder %v762, 0.5
  %vm827 = vcmp.gt.f32.partialorder %v763, 0.5
  %vm828 = vcmp.gt.f32.partialorder %v764, 0.5
  %vm829 = vcmp.gt.f32.partialorder %v765, 0.5
  %vm830 = vcmp.gt.f32.partialorder %v766, 0.5
  %vm831 = vcmp.gt.f32.partialorder %v767, 0.5
  %vm832 = vcmp.gt.f32.partialorder %v768, 0.5
  %vm833 = vcmp.gt.f32.partialorder %v769, 0.5
  %vm834 = vcmp.gt.f32.partialorder %v770, 0.5
  %vm835 = vcmp.gt.f32.partialorder %v771, 0.5
  %vm836 = vcmp.gt.f32.partialorder %v772, 0.5
  %vm837 = vcmp.gt.f32.partialorder %v773, 0.5
  %vm838 = vcmp.gt.f32.partialorder %v774, 0.5
  %vm839 = vcmp.gt.f32.partialorder %v775, 0.5
  %vm840 = vcmp.gt.f32.partialorder %v776, 0.5
  %vm841 = vcmp.gt.f32.partialorder %v777, 0.5
  %vm842 = vcmp.gt.f32.partialorder %v778, 0.5
  %vm843 = vcmp.gt.f32.partialorder %v779, 0.5
  %vm844 = vcmp.gt.f32.partialorder %v780, 0.5
  %vm845 = vcmp.gt.f32.partialorder %v781, 0.5
  %vm846 = vcmp.gt.f32.partialorder %v782, 0.5
  %vm847 = vcmp.gt.f32.partialorder %v783, 0.5
  %vm848 = vcmp.gt.f32.partialorder %v784, 0.5
  %vm849 = vcmp.gt.f32.partialorder %v785, 0.5
  %vm850 = vcmp.gt.f32.partialorder %v786, 0.5
  %vm851 = vcmp.gt.f32.partialorder %v787, 0.5
  %vm852 = vcmp.gt.f32.partialorder %v788, 0.5
  %vm853 = vcmp.gt.f32.partialorder %v789, 0.5
  %vm854 = vcmp.gt.f32.partialorder %v790, 0.5
  %vm855 = vcmp.gt.f32.partialorder %v757, 0.5
  %v856 = vsel %vm823, 1, 0
  %v857 = vsel %vm824, 1, 0
  %v858 = vsel %vm825, 1, 0
  %v859 = vsel %vm826, 1, 0
  %v860 = vsel %vm827, 1, 0
  %v861 = vsel %vm828, 1, 0
  %v862 = vsel %vm829, 1, 0
  %v863 = vsel %vm830, 1, 0
  %v864 = vsel %vm831, 1, 0
  %v865 = vsel %vm832, 1, 0
  %v866 = vsel %vm833, 1, 0
  %v867 = vsel %vm834, 1, 0
  %v868 = vsel %vm835, 1, 0
  %v869 = vsel %vm836, 1, 0
  %v870 = vsel %vm837, 1, 0
  %v871 = vsel %vm838, 1, 0
  %v872 = vsel %vm839, 1, 0
  %v873 = vsel %vm840, 1, 0
  %v874 = vsel %vm841, 1, 0
  %v875 = vsel %vm842, 1, 0
  %v876 = vsel %vm843, 1, 0
  %v877 = vsel %vm844, 1, 0
  %v878 = vsel %vm845, 1, 0
  %v879 = vsel %vm846, 1, 0
  %v880 = vsel %vm847, 1, 0
  %v881 = vsel %vm848, 1, 0
  %v882 = vsel %vm849, 1, 0
  %v883 = vsel %vm850, 1, 0
  %v884 = vsel %vm851, 1, 0
  %v885 = vsel %vm852, 1, 0
  %v886 = vsel %vm853, 1, 0
  %v887 = vsel %vm854, 1, 0
  %888 = vset.pattern.permute.xlu0 0
  %889 = vperm.xlu0 %888, %v856
  %v890 = vpop.permute.xlu0 %889
  %891 = vset.pattern.permute.xlu0 0
  %892 = vperm.xlu0 %891, %v857
  %v893 = vpop.permute.xlu0 %892
  %894 = vset.pattern.permute.xlu0 0
  %895 = vperm.xlu0 %894, %v858
  %v896 = vpop.permute.xlu0 %895
  %897 = vset.pattern.permute.xlu0 0
  %898 = vperm.xlu0 %897, %v859
  %v899 = vpop.permute.xlu0 %898
  %900 = vset.pattern.permute.xlu0 0
  %901 = vperm.xlu0 %900, %v860
  %v902 = vpop.permute.xlu0 %901
  %903 = vset.pattern.permute.xlu0 0
  %904 = vperm.xlu0 %903, %v861
  %v905 = vpop.permute.xlu0 %904
  %906 = vset.pattern.permute.xlu0 0
  %907 = vperm.xlu0 %906, %v862
  %v908 = vpop.permute.xlu0 %907
  %909 = vset.pattern.permute.xlu0 0
  %910 = vperm.xlu0 %909, %v863
  %v911 = vpop.permute.xlu0 %910
  %912 = vset.pattern.permute.xlu0 0
  %913 = vperm.xlu0 %912, %v864
  %v914 = vpop.permute.xlu0 %913
  %915 = vset.pattern.permute.xlu0 0
  %916 = vperm.xlu0 %915, %v865
  %v917 = vpop.permute.xlu0 %916
  %918 = vset.pattern.permute.xlu0 0
  %919 = vperm.xlu0 %918, %v866
  %v920 = vpop.permute.xlu0 %919
  %921 = vset.pattern.permute.xlu0 0
  %922 = vperm.xlu0 %921, %v867
  %v923 = vpop.permute.xlu0 %922
  %924 = vset.pattern.permute.xlu0 0
  %925 = vperm.xlu0 %924, %v868
  %v926 = vpop.permute.xlu0 %925
  %927 = vset.pattern.permute.xlu0 0
  %928 = vperm.xlu0 %927, %v869
  %v929 = vpop.permute.xlu0 %928
  %930 = vset.pattern.permute.xlu0 0
  %931 = vperm.xlu0 %930, %v870
  %v932 = vpop.permute.xlu0 %931
  %933 = vset.pattern.permute.xlu0 0
  %934 = vperm.xlu0 %933, %v871
  %v935 = vpop.permute.xlu0 %934
  %936 = vset.pattern.permute.xlu0 0
  %937 = vperm.xlu0 %936, %v872
  %v938 = vpop.permute.xlu0 %937
  %939 = vset.pattern.permute.xlu0 0
  %940 = vperm.xlu0 %939, %v873
  %v941 = vpop.permute.xlu0 %940
  %942 = vset.pattern.permute.xlu0 0
  %943 = vperm.xlu0 %942, %v874
  %v944 = vpop.permute.xlu0 %943
  %945 = vset.pattern.permute.xlu0 0
  %946 = vperm.xlu0 %945, %v875
  %v947 = vpop.permute.xlu0 %946
  %948 = vset.pattern.permute.xlu0 0
  %949 = vperm.xlu0 %948, %v876
  %v950 = vpop.permute.xlu0 %949
  %951 = vset.pattern.permute.xlu0 0
  %952 = vperm.xlu0 %951, %v877
  %v953 = vpop.permute.xlu0 %952
  %954 = vset.pattern.permute.xlu0 0
  %955 = vperm.xlu0 %954, %v878
  %v956 = vpop.permute.xlu0 %955
  %957 = vset.pattern.permute.xlu0 0
  %958 = vperm.xlu0 %957, %v879
  %v959 = vpop.permute.xlu0 %958
  %960 = vset.pattern.permute.xlu0 0
  %961 = vperm.xlu0 %960, %v880
  %v962 = vpop.permute.xlu0 %961
  %963 = vset.pattern.permute.xlu0 0
  %964 = vperm.xlu0 %963, %v881
  %v965 = vpop.permute.xlu0 %964
  %966 = vset.pattern.permute.xlu0 0
  %967 = vperm.xlu0 %966, %v882
  %v968 = vpop.permute.xlu0 %967
  %969 = vset.pattern.permute.xlu0 0
  %970 = vperm.xlu0 %969, %v883
  %v971 = vpop.permute.xlu0 %970
  %972 = vset.pattern.permute.xlu0 0
  %973 = vperm.xlu0 %972, %v884
  %v974 = vpop.permute.xlu0 %973
  %975 = vset.pattern.permute.xlu0 0
  %976 = vperm.xlu0 %975, %v885
  %v977 = vpop.permute.xlu0 %976
  %978 = vset.pattern.permute.xlu0 0
  %979 = vperm.xlu0 %978, %v886
  %v980 = vpop.permute.xlu0 %979
  %981 = vset.pattern.permute.xlu0 0
  %982 = vperm.xlu0 %981, %v887
  %v983 = vpop.permute.xlu0 %982
  %vm984 = vcmp.eq.s32.totalorder %v890, 1
  %vm985 = vcmp.eq.s32.totalorder %v893, 1
  %vm986 = vcmp.eq.s32.totalorder %v896, 1
  %vm987 = vcmp.eq.s32.totalorder %v899, 1
  %vm988 = vcmp.eq.s32.totalorder %v902, 1
  %vm989 = vcmp.eq.s32.totalorder %v905, 1
  %vm990 = vcmp.eq.s32.totalorder %v908, 1
  %vm991 = vcmp.eq.s32.totalorder %v911, 1
  %vm992 = vcmp.eq.s32.totalorder %v914, 1
  %vm993 = vcmp.eq.s32.totalorder %v917, 1
  %vm994 = vcmp.eq.s32.totalorder %v920, 1
  %vm995 = vcmp.eq.s32.totalorder %v923, 1
  %vm996 = vcmp.eq.s32.totalorder %v926, 1
  %vm997 = vcmp.eq.s32.totalorder %v929, 1
  %vm998 = vcmp.eq.s32.totalorder %v932, 1
  %vm999 = vcmp.eq.s32.totalorder %v935, 1
  %vm1000 = vcmp.eq.s32.totalorder %v938, 1
  %vm1001 = vcmp.eq.s32.totalorder %v941, 1
  %vm1002 = vcmp.eq.s32.totalorder %v944, 1
  %vm1003 = vcmp.eq.s32.totalorder %v947, 1
  %vm1004 = vcmp.eq.s32.totalorder %v950, 1
  %vm1005 = vcmp.eq.s32.totalorder %v953, 1
  %vm1006 = vcmp.eq.s32.totalorder %v956, 1
  %vm1007 = vcmp.eq.s32.totalorder %v959, 1
  %vm1008 = vcmp.eq.s32.totalorder %v962, 1
  %vm1009 = vcmp.eq.s32.totalorder %v965, 1
  %vm1010 = vcmp.eq.s32.totalorder %v968, 1
  %vm1011 = vcmp.eq.s32.totalorder %v971, 1
  %vm1012 = vcmp.eq.s32.totalorder %v974, 1
  %vm1013 = vcmp.eq.s32.totalorder %v977, 1
  %vm1014 = vcmp.eq.s32.totalorder %v980, 1
  %vm1015 = vcmp.eq.s32.totalorder %v983, 1
  %v1016 = vsel %vm855, 1, 0
  %v1017 = vlaneseq
  %v1018 = vshrl.u32 %v1017, 7
  %v1019 = vsub.s32 0, %v1018
  %v1020 = vrot.slane %v1016, %v1019
  %v1021 = vlaneseq
  %v1022 = vshrl.u32 %v1021, 7
  %v1023 = vsub.s32 1, %v1022
  %v1024 = vrot.slane %v1016, %v1023
  %vm1025 = vcmp.eq.s32.totalorder %v1020, 1
  %vm1026 = vcmp.eq.s32.totalorder %v1024, 1
  %vm1027 = vmxor %vm984, %vm1025
  %vm1028 = vmxor %vm984, %vm1026
  %vm1029 = vmxor %vm985, %vm1025
  %vm1030 = vmxor %vm985, %vm1026
  %vm1031 = vmxor %vm986, %vm1025
  %vm1032 = vmxor %vm986, %vm1026
  %vm1033 = vmxor %vm987, %vm1025
  %vm1034 = vmxor %vm987, %vm1026
  %vm1035 = vmxor %vm988, %vm1025
  %vm1036 = vmxor %vm988, %vm1026
  %vm1037 = vmxor %vm989, %vm1025
  %vm1038 = vmxor %vm989, %vm1026
  %vm1039 = vmxor %vm990, %vm1025
  %vm1040 = vmxor %vm990, %vm1026
  %vm1041 = vmxor %vm991, %vm1025
  %vm1042 = vmxor %vm991, %vm1026
  %vm1043 = vmxor %vm992, %vm1025
  %vm1044 = vmxor %vm992, %vm1026
  %vm1045 = vmxor %vm993, %vm1025
  %vm1046 = vmxor %vm993, %vm1026
  %vm1047 = vmxor %vm994, %vm1025
  %vm1048 = vmxor %vm994, %vm1026
  %vm1049 = vmxor %vm995, %vm1025
  %vm1050 = vmxor %vm995, %vm1026
  %vm1051 = vmxor %vm996, %vm1025
  %vm1052 = vmxor %vm996, %vm1026
  %vm1053 = vmxor %vm997, %vm1025
  %vm1054 = vmxor %vm997, %vm1026
  %vm1055 = vmxor %vm998, %vm1025
  %vm1056 = vmxor %vm998, %vm1026
  %vm1057 = vmxor %vm999, %vm1025
  %vm1058 = vmxor %vm999, %vm1026
  %vm1059 = vmxor %vm1000, %vm1025
  %vm1060 = vmxor %vm1000, %vm1026
  %vm1061 = vmxor %vm1001, %vm1025
  %vm1062 = vmxor %vm1001, %vm1026
  %vm1063 = vmxor %vm1002, %vm1025
  %vm1064 = vmxor %vm1002, %vm1026
  %vm1065 = vmxor %vm1003, %vm1025
  %vm1066 = vmxor %vm1003, %vm1026
  %vm1067 = vmxor %vm1004, %vm1025
  %vm1068 = vmxor %vm1004, %vm1026
  %vm1069 = vmxor %vm1005, %vm1025
  %vm1070 = vmxor %vm1005, %vm1026
  %vm1071 = vmxor %vm1006, %vm1025
  %vm1072 = vmxor %vm1006, %vm1026
  %vm1073 = vmxor %vm1007, %vm1025
  %vm1074 = vmxor %vm1007, %vm1026
  %vm1075 = vmxor %vm1008, %vm1025
  %vm1076 = vmxor %vm1008, %vm1026
  %vm1077 = vmxor %vm1009, %vm1025
  %vm1078 = vmxor %vm1009, %vm1026
  %vm1079 = vmxor %vm1010, %vm1025
  %vm1080 = vmxor %vm1010, %vm1026
  %vm1081 = vmxor %vm1011, %vm1025
  %vm1082 = vmxor %vm1011, %vm1026
  %vm1083 = vmxor %vm1012, %vm1025
  %vm1084 = vmxor %vm1012, %vm1026
  %vm1085 = vmxor %vm1013, %vm1025
  %vm1086 = vmxor %vm1013, %vm1026
  %vm1087 = vmxor %vm1014, %vm1025
  %vm1088 = vmxor %vm1014, %vm1026
  %vm1089 = vmxor %vm1015, %vm1025
  %vm1090 = vmxor %vm1015, %vm1026
  %v1091 = vsel %vm1027, %v693, 1e+30
  %v1092 = vsel %vm1028, %v694, 1e+30
  %v1093 = vsel %vm1029, %v695, 1e+30
  %v1094 = vsel %vm1030, %v696, 1e+30
  %v1095 = vsel %vm1031, %v697, 1e+30
  %v1096 = vsel %vm1032, %v698, 1e+30
  %v1097 = vsel %vm1033, %v699, 1e+30
  %v1098 = vsel %vm1034, %v700, 1e+30
  %v1099 = vsel %vm1035, %v701, 1e+30
  %v1100 = vsel %vm1036, %v702, 1e+30
  %v1101 = vsel %vm1037, %v703, 1e+30
  %v1102 = vsel %vm1038, %v704, 1e+30
  %v1103 = vsel %vm1039, %v705, 1e+30
  %v1104 = vsel %vm1040, %v706, 1e+30
  %v1105 = vsel %vm1041, %v707, 1e+30
  %v1106 = vsel %vm1042, %v708, 1e+30
  %v1107 = vsel %vm1043, %v709, 1e+30
  %v1108 = vsel %vm1044, %v710, 1e+30
  %v1109 = vsel %vm1045, %v711, 1e+30
  %v1110 = vsel %vm1046, %v712, 1e+30
  %v1111 = vsel %vm1047, %v713, 1e+30
  %v1112 = vsel %vm1048, %v714, 1e+30
  %v1113 = vsel %vm1049, %v715, 1e+30
  %v1114 = vsel %vm1050, %v716, 1e+30
  %v1115 = vsel %vm1051, %v717, 1e+30
  %v1116 = vsel %vm1052, %v718, 1e+30
  %v1117 = vsel %vm1053, %v719, 1e+30
  %v1118 = vsel %vm1054, %v720, 1e+30
  %v1119 = vsel %vm1055, %v721, 1e+30
  %v1120 = vsel %vm1056, %v722, 1e+30
  %v1121 = vsel %vm1057, %v723, 1e+30
  %v1122 = vsel %vm1058, %v724, 1e+30
  %v1123 = vsel %vm1059, %v725, 1e+30
  %v1124 = vsel %vm1060, %v726, 1e+30
  %v1125 = vsel %vm1061, %v727, 1e+30
  %v1126 = vsel %vm1062, %v728, 1e+30
  %v1127 = vsel %vm1063, %v729, 1e+30
  %v1128 = vsel %vm1064, %v730, 1e+30
  %v1129 = vsel %vm1065, %v731, 1e+30
  %v1130 = vsel %vm1066, %v732, 1e+30
  %v1131 = vsel %vm1067, %v733, 1e+30
  %v1132 = vsel %vm1068, %v734, 1e+30
  %v1133 = vsel %vm1069, %v735, 1e+30
  %v1134 = vsel %vm1070, %v736, 1e+30
  %v1135 = vsel %vm1071, %v737, 1e+30
  %v1136 = vsel %vm1072, %v738, 1e+30
  %v1137 = vsel %vm1073, %v739, 1e+30
  %v1138 = vsel %vm1074, %v740, 1e+30
  %v1139 = vsel %vm1075, %v741, 1e+30
  %v1140 = vsel %vm1076, %v742, 1e+30
  %v1141 = vsel %vm1077, %v743, 1e+30
  %v1142 = vsel %vm1078, %v744, 1e+30
  %v1143 = vsel %vm1079, %v745, 1e+30
  %v1144 = vsel %vm1080, %v746, 1e+30
  %v1145 = vsel %vm1081, %v747, 1e+30
  %v1146 = vsel %vm1082, %v748, 1e+30
  %v1147 = vsel %vm1083, %v749, 1e+30
  %v1148 = vsel %vm1084, %v750, 1e+30
  %v1149 = vsel %vm1085, %v751, 1e+30
  %v1150 = vsel %vm1086, %v752, 1e+30
  %v1151 = vsel %vm1087, %v753, 1e+30
  %v1152 = vsel %vm1088, %v754, 1e+30
  %v1153 = vsel %vm1089, %v755, 1e+30
  %v1154 = vsel %vm1090, %v756, 1e+30
  %v1155 = vmin.f32 %v1091, %v1095
  %v1156 = vmin.f32 %v1093, %v1097
  %v1157 = vmin.f32 %v1155, %v1099
  %v1158 = vmin.f32 %v1156, %v1101
  %v1159 = vmin.f32 %v1157, %v1103
  %v1160 = vmin.f32 %v1158, %v1105
  %v1161 = vmin.f32 %v1159, %v1107
  %v1162 = vmin.f32 %v1160, %v1109
  %v1163 = vmin.f32 %v1161, %v1111
  %v1164 = vmin.f32 %v1162, %v1113
  %v1165 = vmin.f32 %v1163, %v1115
  %v1166 = vmin.f32 %v1164, %v1117
  %v1167 = vmin.f32 %v1165, %v1119
  %v1168 = vmin.f32 %v1166, %v1121
  %v1169 = vmin.f32 %v1167, %v1123
  %v1170 = vmin.f32 %v1168, %v1125
  %v1171 = vmin.f32 %v1169, %v1127
  %v1172 = vmin.f32 %v1170, %v1129
  %v1173 = vmin.f32 %v1171, %v1131
  %v1174 = vmin.f32 %v1172, %v1133
  %v1175 = vmin.f32 %v1173, %v1135
  %v1176 = vmin.f32 %v1174, %v1137
  %v1177 = vmin.f32 %v1175, %v1139
  %v1178 = vmin.f32 %v1176, %v1141
  %v1179 = vmin.f32 %v1177, %v1143
  %v1180 = vmin.f32 %v1178, %v1145
  %v1181 = vmin.f32 %v1179, %v1147
  %v1182 = vmin.f32 %v1180, %v1149
  %v1183 = vmin.f32 %v1181, %v1151
  %v1184 = vmin.f32 %v1182, %v1153
  %v1185 = vmin.f32 %v1183, %v1184
  %v1186 = vrot.slane %v1185, 4
  %v1187 = vmin.f32 %v1185, %v1186
  %v1188 = vrot.slane %v1187, 2
  %v1189 = vmin.f32 %v1187, %v1188
  %v1190 = vrot.slane %v1189, 1
  %v1191 = vmin.f32 %v1189, %v1190
  %v1192 = vmin.f32 %v1092, %v1096
  %v1193 = vmin.f32 %v1094, %v1098
  %v1194 = vmin.f32 %v1192, %v1100
  %v1195 = vmin.f32 %v1193, %v1102
  %v1196 = vmin.f32 %v1194, %v1104
  %v1197 = vmin.f32 %v1195, %v1106
  %v1198 = vmin.f32 %v1196, %v1108
  %v1199 = vmin.f32 %v1197, %v1110
  %v1200 = vmin.f32 %v1198, %v1112
  %v1201 = vmin.f32 %v1199, %v1114
  %v1202 = vmin.f32 %v1200, %v1116
  %v1203 = vmin.f32 %v1201, %v1118
  %v1204 = vmin.f32 %v1202, %v1120
  %v1205 = vmin.f32 %v1203, %v1122
  %v1206 = vmin.f32 %v1204, %v1124
  %v1207 = vmin.f32 %v1205, %v1126
  %v1208 = vmin.f32 %v1206, %v1128
  %v1209 = vmin.f32 %v1207, %v1130
  %v1210 = vmin.f32 %v1208, %v1132
  %v1211 = vmin.f32 %v1209, %v1134
  %v1212 = vmin.f32 %v1210, %v1136
  %v1213 = vmin.f32 %v1211, %v1138
  %v1214 = vmin.f32 %v1212, %v1140
  %v1215 = vmin.f32 %v1213, %v1142
  %v1216 = vmin.f32 %v1214, %v1144
  %v1217 = vmin.f32 %v1215, %v1146
  %v1218 = vmin.f32 %v1216, %v1148
  %v1219 = vmin.f32 %v1217, %v1150
  %v1220 = vmin.f32 %v1218, %v1152
  %v1221 = vmin.f32 %v1219, %v1154
  %v1222 = vmin.f32 %v1220, %v1221
  %v1223 = vrot.slane %v1222, 4
  %v1224 = vmin.f32 %v1222, %v1223
  %v1225 = vrot.slane %v1224, 2
  %v1226 = vmin.f32 %v1224, %v1225
  %v1227 = vrot.slane %v1226, 1
  %v1228 = vmin.f32 %v1226, %v1227
  %vm1229 = vcmp.gt.f32.partialorder %v1191, 5e+29
  %vm1230 = vcmp.gt.f32.partialorder %v1228, 5e+29
  %v1231 = vsel %vm1229, 0.0, %v1191
  %v1232 = vsel %vm1230, 0.0, %v1228
  %vm1233 = vcmp.gt.f32.partialorder %v791, 0.5
  %vm1234 = vcmp.gt.f32.partialorder %v792, 0.5
  %vm1235 = vcmp.gt.f32.partialorder %v793, 0.5
  %vm1236 = vcmp.gt.f32.partialorder %v794, 0.5
  %vm1237 = vcmp.gt.f32.partialorder %v795, 0.5
  %vm1238 = vcmp.gt.f32.partialorder %v796, 0.5
  %vm1239 = vcmp.gt.f32.partialorder %v797, 0.5
  %vm1240 = vcmp.gt.f32.partialorder %v798, 0.5
  %vm1241 = vcmp.gt.f32.partialorder %v799, 0.5
  %vm1242 = vcmp.gt.f32.partialorder %v800, 0.5
  %vm1243 = vcmp.gt.f32.partialorder %v801, 0.5
  %vm1244 = vcmp.gt.f32.partialorder %v802, 0.5
  %vm1245 = vcmp.gt.f32.partialorder %v803, 0.5
  %vm1246 = vcmp.gt.f32.partialorder %v804, 0.5
  %vm1247 = vcmp.gt.f32.partialorder %v805, 0.5
  %vm1248 = vcmp.gt.f32.partialorder %v806, 0.5
  %vm1249 = vcmp.gt.f32.partialorder %v807, 0.5
  %vm1250 = vcmp.gt.f32.partialorder %v808, 0.5
  %vm1251 = vcmp.gt.f32.partialorder %v809, 0.5
  %vm1252 = vcmp.gt.f32.partialorder %v810, 0.5
  %vm1253 = vcmp.gt.f32.partialorder %v811, 0.5
  %vm1254 = vcmp.gt.f32.partialorder %v812, 0.5
  %vm1255 = vcmp.gt.f32.partialorder %v813, 0.5
  %vm1256 = vcmp.gt.f32.partialorder %v814, 0.5
  %vm1257 = vcmp.gt.f32.partialorder %v815, 0.5
  %vm1258 = vcmp.gt.f32.partialorder %v816, 0.5
  %vm1259 = vcmp.gt.f32.partialorder %v817, 0.5
  %vm1260 = vcmp.gt.f32.partialorder %v818, 0.5
  %vm1261 = vcmp.gt.f32.partialorder %v819, 0.5
  %vm1262 = vcmp.gt.f32.partialorder %v820, 0.5
  %vm1263 = vcmp.gt.f32.partialorder %v821, 0.5
  %vm1264 = vcmp.gt.f32.partialorder %v822, 0.5
  %vm1265 = vcmp.gt.f32.partialorder %v758, 0.5
  %v1266 = vsel %vm1233, 1, 0
  %v1267 = vsel %vm1234, 1, 0
  %v1268 = vsel %vm1235, 1, 0
  %v1269 = vsel %vm1236, 1, 0
  %v1270 = vsel %vm1237, 1, 0
  %v1271 = vsel %vm1238, 1, 0
  %v1272 = vsel %vm1239, 1, 0
  %v1273 = vsel %vm1240, 1, 0
  %v1274 = vsel %vm1241, 1, 0
  %v1275 = vsel %vm1242, 1, 0
  %v1276 = vsel %vm1243, 1, 0
  %v1277 = vsel %vm1244, 1, 0
  %v1278 = vsel %vm1245, 1, 0
  %v1279 = vsel %vm1246, 1, 0
  %v1280 = vsel %vm1247, 1, 0
  %v1281 = vsel %vm1248, 1, 0
  %v1282 = vsel %vm1249, 1, 0
  %v1283 = vsel %vm1250, 1, 0
  %v1284 = vsel %vm1251, 1, 0
  %v1285 = vsel %vm1252, 1, 0
  %v1286 = vsel %vm1253, 1, 0
  %v1287 = vsel %vm1254, 1, 0
  %v1288 = vsel %vm1255, 1, 0
  %v1289 = vsel %vm1256, 1, 0
  %v1290 = vsel %vm1257, 1, 0
  %v1291 = vsel %vm1258, 1, 0
  %v1292 = vsel %vm1259, 1, 0
  %v1293 = vsel %vm1260, 1, 0
  %v1294 = vsel %vm1261, 1, 0
  %v1295 = vsel %vm1262, 1, 0
  %v1296 = vsel %vm1263, 1, 0
  %v1297 = vsel %vm1264, 1, 0
  %1298 = vset.pattern.permute.xlu0 0
  %1299 = vperm.xlu0 %1298, %v1266
  %v1300 = vpop.permute.xlu0 %1299
  %1301 = vset.pattern.permute.xlu0 0
  %1302 = vperm.xlu0 %1301, %v1267
  %v1303 = vpop.permute.xlu0 %1302
  %1304 = vset.pattern.permute.xlu0 0
  %1305 = vperm.xlu0 %1304, %v1268
  %v1306 = vpop.permute.xlu0 %1305
  %1307 = vset.pattern.permute.xlu0 0
  %1308 = vperm.xlu0 %1307, %v1269
  %v1309 = vpop.permute.xlu0 %1308
  %1310 = vset.pattern.permute.xlu0 0
  %1311 = vperm.xlu0 %1310, %v1270
  %v1312 = vpop.permute.xlu0 %1311
  %1313 = vset.pattern.permute.xlu0 0
  %1314 = vperm.xlu0 %1313, %v1271
  %v1315 = vpop.permute.xlu0 %1314
  %1316 = vset.pattern.permute.xlu0 0
  %1317 = vperm.xlu0 %1316, %v1272
  %v1318 = vpop.permute.xlu0 %1317
  %1319 = vset.pattern.permute.xlu0 0
  %1320 = vperm.xlu0 %1319, %v1273
  %v1321 = vpop.permute.xlu0 %1320
  %1322 = vset.pattern.permute.xlu0 0
  %1323 = vperm.xlu0 %1322, %v1274
  %v1324 = vpop.permute.xlu0 %1323
  %1325 = vset.pattern.permute.xlu0 0
  %1326 = vperm.xlu0 %1325, %v1275
  %v1327 = vpop.permute.xlu0 %1326
  %1328 = vset.pattern.permute.xlu0 0
  %1329 = vperm.xlu0 %1328, %v1276
  %v1330 = vpop.permute.xlu0 %1329
  %1331 = vset.pattern.permute.xlu0 0
  %1332 = vperm.xlu0 %1331, %v1277
  %v1333 = vpop.permute.xlu0 %1332
  %1334 = vset.pattern.permute.xlu0 0
  %1335 = vperm.xlu0 %1334, %v1278
  %v1336 = vpop.permute.xlu0 %1335
  %1337 = vset.pattern.permute.xlu0 0
  %1338 = vperm.xlu0 %1337, %v1279
  %v1339 = vpop.permute.xlu0 %1338
  %1340 = vset.pattern.permute.xlu0 0
  %1341 = vperm.xlu0 %1340, %v1280
  %v1342 = vpop.permute.xlu0 %1341
  %1343 = vset.pattern.permute.xlu0 0
  %1344 = vperm.xlu0 %1343, %v1281
  %v1345 = vpop.permute.xlu0 %1344
  %1346 = vset.pattern.permute.xlu0 0
  %1347 = vperm.xlu0 %1346, %v1282
  %v1348 = vpop.permute.xlu0 %1347
  %1349 = vset.pattern.permute.xlu0 0
  %1350 = vperm.xlu0 %1349, %v1283
  %v1351 = vpop.permute.xlu0 %1350
  %1352 = vset.pattern.permute.xlu0 0
  %1353 = vperm.xlu0 %1352, %v1284
  %v1354 = vpop.permute.xlu0 %1353
  %1355 = vset.pattern.permute.xlu0 0
  %1356 = vperm.xlu0 %1355, %v1285
  %v1357 = vpop.permute.xlu0 %1356
  %1358 = vset.pattern.permute.xlu0 0
  %1359 = vperm.xlu0 %1358, %v1286
  %v1360 = vpop.permute.xlu0 %1359
  %1361 = vset.pattern.permute.xlu0 0
  %1362 = vperm.xlu0 %1361, %v1287
  %v1363 = vpop.permute.xlu0 %1362
  %1364 = vset.pattern.permute.xlu0 0
  %1365 = vperm.xlu0 %1364, %v1288
  %v1366 = vpop.permute.xlu0 %1365
  %1367 = vset.pattern.permute.xlu0 0
  %1368 = vperm.xlu0 %1367, %v1289
  %v1369 = vpop.permute.xlu0 %1368
  %1370 = vset.pattern.permute.xlu0 0
  %1371 = vperm.xlu0 %1370, %v1290
  %v1372 = vpop.permute.xlu0 %1371
  %1373 = vset.pattern.permute.xlu0 0
  %1374 = vperm.xlu0 %1373, %v1291
  %v1375 = vpop.permute.xlu0 %1374
  %1376 = vset.pattern.permute.xlu0 0
  %1377 = vperm.xlu0 %1376, %v1292
  %v1378 = vpop.permute.xlu0 %1377
  %1379 = vset.pattern.permute.xlu0 0
  %1380 = vperm.xlu0 %1379, %v1293
  %v1381 = vpop.permute.xlu0 %1380
  %1382 = vset.pattern.permute.xlu0 0
  %1383 = vperm.xlu0 %1382, %v1294
  %v1384 = vpop.permute.xlu0 %1383
  %1385 = vset.pattern.permute.xlu0 0
  %1386 = vperm.xlu0 %1385, %v1295
  %v1387 = vpop.permute.xlu0 %1386
  %1388 = vset.pattern.permute.xlu0 0
  %1389 = vperm.xlu0 %1388, %v1296
  %v1390 = vpop.permute.xlu0 %1389
  %1391 = vset.pattern.permute.xlu0 0
  %1392 = vperm.xlu0 %1391, %v1297
  %v1393 = vpop.permute.xlu0 %1392
  %vm1394 = vcmp.eq.s32.totalorder %v1300, 1
  %vm1395 = vcmp.eq.s32.totalorder %v1303, 1
  %vm1396 = vcmp.eq.s32.totalorder %v1306, 1
  %vm1397 = vcmp.eq.s32.totalorder %v1309, 1
  %vm1398 = vcmp.eq.s32.totalorder %v1312, 1
  %vm1399 = vcmp.eq.s32.totalorder %v1315, 1
  %vm1400 = vcmp.eq.s32.totalorder %v1318, 1
  %vm1401 = vcmp.eq.s32.totalorder %v1321, 1
  %vm1402 = vcmp.eq.s32.totalorder %v1324, 1
  %vm1403 = vcmp.eq.s32.totalorder %v1327, 1
  %vm1404 = vcmp.eq.s32.totalorder %v1330, 1
  %vm1405 = vcmp.eq.s32.totalorder %v1333, 1
  %vm1406 = vcmp.eq.s32.totalorder %v1336, 1
  %vm1407 = vcmp.eq.s32.totalorder %v1339, 1
  %vm1408 = vcmp.eq.s32.totalorder %v1342, 1
  %vm1409 = vcmp.eq.s32.totalorder %v1345, 1
  %vm1410 = vcmp.eq.s32.totalorder %v1348, 1
  %vm1411 = vcmp.eq.s32.totalorder %v1351, 1
  %vm1412 = vcmp.eq.s32.totalorder %v1354, 1
  %vm1413 = vcmp.eq.s32.totalorder %v1357, 1
  %vm1414 = vcmp.eq.s32.totalorder %v1360, 1
  %vm1415 = vcmp.eq.s32.totalorder %v1363, 1
  %vm1416 = vcmp.eq.s32.totalorder %v1366, 1
  %vm1417 = vcmp.eq.s32.totalorder %v1369, 1
  %vm1418 = vcmp.eq.s32.totalorder %v1372, 1
  %vm1419 = vcmp.eq.s32.totalorder %v1375, 1
  %vm1420 = vcmp.eq.s32.totalorder %v1378, 1
  %vm1421 = vcmp.eq.s32.totalorder %v1381, 1
  %vm1422 = vcmp.eq.s32.totalorder %v1384, 1
  %vm1423 = vcmp.eq.s32.totalorder %v1387, 1
  %vm1424 = vcmp.eq.s32.totalorder %v1390, 1
  %vm1425 = vcmp.eq.s32.totalorder %v1393, 1
  %v1426 = vsel %vm1265, 1, 0
  %v1427 = vlaneseq
  %v1428 = vshrl.u32 %v1427, 7
  %v1429 = vsub.s32 0, %v1428
  %v1430 = vrot.slane %v1426, %v1429
  %v1431 = vlaneseq
  %v1432 = vshrl.u32 %v1431, 7
  %v1433 = vsub.s32 1, %v1432
  %v1434 = vrot.slane %v1426, %v1433
  %vm1435 = vcmp.eq.s32.totalorder %v1430, 1
  %vm1436 = vcmp.eq.s32.totalorder %v1434, 1
  %vm1437 = vmxor %vm1394, %vm1435
  %vm1438 = vmxor %vm1394, %vm1436
  %vm1439 = vmxor %vm1395, %vm1435
  %vm1440 = vmxor %vm1395, %vm1436
  %vm1441 = vmxor %vm1396, %vm1435
  %vm1442 = vmxor %vm1396, %vm1436
  %vm1443 = vmxor %vm1397, %vm1435
  %vm1444 = vmxor %vm1397, %vm1436
  %vm1445 = vmxor %vm1398, %vm1435
  %vm1446 = vmxor %vm1398, %vm1436
  %vm1447 = vmxor %vm1399, %vm1435
  %vm1448 = vmxor %vm1399, %vm1436
  %vm1449 = vmxor %vm1400, %vm1435
  %vm1450 = vmxor %vm1400, %vm1436
  %vm1451 = vmxor %vm1401, %vm1435
  %vm1452 = vmxor %vm1401, %vm1436
  %vm1453 = vmxor %vm1402, %vm1435
  %vm1454 = vmxor %vm1402, %vm1436
  %vm1455 = vmxor %vm1403, %vm1435
  %vm1456 = vmxor %vm1403, %vm1436
  %vm1457 = vmxor %vm1404, %vm1435
  %vm1458 = vmxor %vm1404, %vm1436
  %vm1459 = vmxor %vm1405, %vm1435
  %vm1460 = vmxor %vm1405, %vm1436
  %vm1461 = vmxor %vm1406, %vm1435
  %vm1462 = vmxor %vm1406, %vm1436
  %vm1463 = vmxor %vm1407, %vm1435
  %vm1464 = vmxor %vm1407, %vm1436
  %vm1465 = vmxor %vm1408, %vm1435
  %vm1466 = vmxor %vm1408, %vm1436
  %vm1467 = vmxor %vm1409, %vm1435
  %vm1468 = vmxor %vm1409, %vm1436
  %vm1469 = vmxor %vm1410, %vm1435
  %vm1470 = vmxor %vm1410, %vm1436
  %vm1471 = vmxor %vm1411, %vm1435
  %vm1472 = vmxor %vm1411, %vm1436
  %vm1473 = vmxor %vm1412, %vm1435
  %vm1474 = vmxor %vm1412, %vm1436
  %vm1475 = vmxor %vm1413, %vm1435
  %vm1476 = vmxor %vm1413, %vm1436
  %vm1477 = vmxor %vm1414, %vm1435
  %vm1478 = vmxor %vm1414, %vm1436
  %vm1479 = vmxor %vm1415, %vm1435
  %vm1480 = vmxor %vm1415, %vm1436
  %vm1481 = vmxor %vm1416, %vm1435
  %vm1482 = vmxor %vm1416, %vm1436
  %vm1483 = vmxor %vm1417, %vm1435
  %vm1484 = vmxor %vm1417, %vm1436
  %vm1485 = vmxor %vm1418, %vm1435
  %vm1486 = vmxor %vm1418, %vm1436
  %vm1487 = vmxor %vm1419, %vm1435
  %vm1488 = vmxor %vm1419, %vm1436
  %vm1489 = vmxor %vm1420, %vm1435
  %vm1490 = vmxor %vm1420, %vm1436
  %vm1491 = vmxor %vm1421, %vm1435
  %vm1492 = vmxor %vm1421, %vm1436
  %vm1493 = vmxor %vm1422, %vm1435
  %vm1494 = vmxor %vm1422, %vm1436
  %vm1495 = vmxor %vm1423, %vm1435
  %vm1496 = vmxor %vm1423, %vm1436
  %vm1497 = vmxor %vm1424, %vm1435
  %vm1498 = vmxor %vm1424, %vm1436
  %vm1499 = vmxor %vm1425, %vm1435
  %vm1500 = vmxor %vm1425, %vm1436
  %v1501 = vsel %vm1437, %v693, 1e+30
  %v1502 = vsel %vm1438, %v694, 1e+30
  %v1503 = vsel %vm1439, %v695, 1e+30
  %v1504 = vsel %vm1440, %v696, 1e+30
  %v1505 = vsel %vm1441, %v697, 1e+30
  %v1506 = vsel %vm1442, %v698, 1e+30
  %v1507 = vsel %vm1443, %v699, 1e+30
  %v1508 = vsel %vm1444, %v700, 1e+30
  %v1509 = vsel %vm1445, %v701, 1e+30
  %v1510 = vsel %vm1446, %v702, 1e+30
  %v1511 = vsel %vm1447, %v703, 1e+30
  %v1512 = vsel %vm1448, %v704, 1e+30
  %v1513 = vsel %vm1449, %v705, 1e+30
  %v1514 = vsel %vm1450, %v706, 1e+30
  %v1515 = vsel %vm1451, %v707, 1e+30
  %v1516 = vsel %vm1452, %v708, 1e+30
  %v1517 = vsel %vm1453, %v709, 1e+30
  %v1518 = vsel %vm1454, %v710, 1e+30
  %v1519 = vsel %vm1455, %v711, 1e+30
  %v1520 = vsel %vm1456, %v712, 1e+30
  %v1521 = vsel %vm1457, %v713, 1e+30
  %v1522 = vsel %vm1458, %v714, 1e+30
  %v1523 = vsel %vm1459, %v715, 1e+30
  %v1524 = vsel %vm1460, %v716, 1e+30
  %v1525 = vsel %vm1461, %v717, 1e+30
  %v1526 = vsel %vm1462, %v718, 1e+30
  %v1527 = vsel %vm1463, %v719, 1e+30
  %v1528 = vsel %vm1464, %v720, 1e+30
  %v1529 = vsel %vm1465, %v721, 1e+30
  %v1530 = vsel %vm1466, %v722, 1e+30
  %v1531 = vsel %vm1467, %v723, 1e+30
  %v1532 = vsel %vm1468, %v724, 1e+30
  %v1533 = vsel %vm1469, %v725, 1e+30
  %v1534 = vsel %vm1470, %v726, 1e+30
  %v1535 = vsel %vm1471, %v727, 1e+30
  %v1536 = vsel %vm1472, %v728, 1e+30
  %v1537 = vsel %vm1473, %v729, 1e+30
  %v1538 = vsel %vm1474, %v730, 1e+30
  %v1539 = vsel %vm1475, %v731, 1e+30
  %v1540 = vsel %vm1476, %v732, 1e+30
  %v1541 = vsel %vm1477, %v733, 1e+30
  %v1542 = vsel %vm1478, %v734, 1e+30
  %v1543 = vsel %vm1479, %v735, 1e+30
  %v1544 = vsel %vm1480, %v736, 1e+30
  %v1545 = vsel %vm1481, %v737, 1e+30
  %v1546 = vsel %vm1482, %v738, 1e+30
  %v1547 = vsel %vm1483, %v739, 1e+30
  %v1548 = vsel %vm1484, %v740, 1e+30
  %v1549 = vsel %vm1485, %v741, 1e+30
  %v1550 = vsel %vm1486, %v742, 1e+30
  %v1551 = vsel %vm1487, %v743, 1e+30
  %v1552 = vsel %vm1488, %v744, 1e+30
  %v1553 = vsel %vm1489, %v745, 1e+30
  %v1554 = vsel %vm1490, %v746, 1e+30
  %v1555 = vsel %vm1491, %v747, 1e+30
  %v1556 = vsel %vm1492, %v748, 1e+30
  %v1557 = vsel %vm1493, %v749, 1e+30
  %v1558 = vsel %vm1494, %v750, 1e+30
  %v1559 = vsel %vm1495, %v751, 1e+30
  %v1560 = vsel %vm1496, %v752, 1e+30
  %v1561 = vsel %vm1497, %v753, 1e+30
  %v1562 = vsel %vm1498, %v754, 1e+30
  %v1563 = vsel %vm1499, %v755, 1e+30
  %v1564 = vsel %vm1500, %v756, 1e+30
  %v1565 = vmin.f32 %v1501, %v1505
  %v1566 = vmin.f32 %v1503, %v1507
  %v1567 = vmin.f32 %v1565, %v1509
  %v1568 = vmin.f32 %v1566, %v1511
  %v1569 = vmin.f32 %v1567, %v1513
  %v1570 = vmin.f32 %v1568, %v1515
  %v1571 = vmin.f32 %v1569, %v1517
  %v1572 = vmin.f32 %v1570, %v1519
  %v1573 = vmin.f32 %v1571, %v1521
  %v1574 = vmin.f32 %v1572, %v1523
  %v1575 = vmin.f32 %v1573, %v1525
  %v1576 = vmin.f32 %v1574, %v1527
  %v1577 = vmin.f32 %v1575, %v1529
  %v1578 = vmin.f32 %v1576, %v1531
  %v1579 = vmin.f32 %v1577, %v1533
  %v1580 = vmin.f32 %v1578, %v1535
  %v1581 = vmin.f32 %v1579, %v1537
  %v1582 = vmin.f32 %v1580, %v1539
  %v1583 = vmin.f32 %v1581, %v1541
  %v1584 = vmin.f32 %v1582, %v1543
  %v1585 = vmin.f32 %v1583, %v1545
  %v1586 = vmin.f32 %v1584, %v1547
  %v1587 = vmin.f32 %v1585, %v1549
  %v1588 = vmin.f32 %v1586, %v1551
  %v1589 = vmin.f32 %v1587, %v1553
  %v1590 = vmin.f32 %v1588, %v1555
  %v1591 = vmin.f32 %v1589, %v1557
  %v1592 = vmin.f32 %v1590, %v1559
  %v1593 = vmin.f32 %v1591, %v1561
  %v1594 = vmin.f32 %v1592, %v1563
  %v1595 = vmin.f32 %v1593, %v1594
  %v1596 = vrot.slane %v1595, 4
  %v1597 = vmin.f32 %v1595, %v1596
  %v1598 = vrot.slane %v1597, 2
  %v1599 = vmin.f32 %v1597, %v1598
  %v1600 = vrot.slane %v1599, 1
  %v1601 = vmin.f32 %v1599, %v1600
  %v1602 = vmin.f32 %v1502, %v1506
  %v1603 = vmin.f32 %v1504, %v1508
  %v1604 = vmin.f32 %v1602, %v1510
  %v1605 = vmin.f32 %v1603, %v1512
  %v1606 = vmin.f32 %v1604, %v1514
  %v1607 = vmin.f32 %v1605, %v1516
  %v1608 = vmin.f32 %v1606, %v1518
  %v1609 = vmin.f32 %v1607, %v1520
  %v1610 = vmin.f32 %v1608, %v1522
  %v1611 = vmin.f32 %v1609, %v1524
  %v1612 = vmin.f32 %v1610, %v1526
  %v1613 = vmin.f32 %v1611, %v1528
  %v1614 = vmin.f32 %v1612, %v1530
  %v1615 = vmin.f32 %v1613, %v1532
  %v1616 = vmin.f32 %v1614, %v1534
  %v1617 = vmin.f32 %v1615, %v1536
  %v1618 = vmin.f32 %v1616, %v1538
  %v1619 = vmin.f32 %v1617, %v1540
  %v1620 = vmin.f32 %v1618, %v1542
  %v1621 = vmin.f32 %v1619, %v1544
  %v1622 = vmin.f32 %v1620, %v1546
  %v1623 = vmin.f32 %v1621, %v1548
  %v1624 = vmin.f32 %v1622, %v1550
  %v1625 = vmin.f32 %v1623, %v1552
  %v1626 = vmin.f32 %v1624, %v1554
  %v1627 = vmin.f32 %v1625, %v1556
  %v1628 = vmin.f32 %v1626, %v1558
  %v1629 = vmin.f32 %v1627, %v1560
  %v1630 = vmin.f32 %v1628, %v1562
  %v1631 = vmin.f32 %v1629, %v1564
  %v1632 = vmin.f32 %v1630, %v1631
  %v1633 = vrot.slane %v1632, 4
  %v1634 = vmin.f32 %v1632, %v1633
  %v1635 = vrot.slane %v1634, 2
  %v1636 = vmin.f32 %v1634, %v1635
  %v1637 = vrot.slane %v1636, 1
  %v1638 = vmin.f32 %v1636, %v1637
  %vm1639 = vcmp.gt.f32.partialorder %v1601, 5e+29
  %vm1640 = vcmp.gt.f32.partialorder %v1638, 5e+29
  %v1641 = vsel %vm1639, 0.0, %v1601
  %v1642 = vsel %vm1640, 0.0, %v1638
  %v1643 = vsub.f32 %v757, %v758
  %v1644 = vmul.f32 %v1643, %v1643
  %v1645 = vadd.f32 %v1231, %v1641
  %v1646 = vadd.f32 %v1232, %v1642
  %v1649 = vcombine.low %v1645, %v1646
  %v1651 = vunpack.c.l.s4 1966171168
  %v1652 = vunpack.c.0.s8 %v1651
  %v1653 = vlaneseq
  %v1654 = vshrl.u32 %v1653, 7
  %v1655 = vsub.s32 %v1652, %v1654
  %v1656 = vrot.slane %v1649, %v1655
  %v1658 = vunpack.c.l.s4 1966171168
  %v1659 = vunpack.c.0.s8 %v1658
  %v1660 = vlaneseq
  %v1661 = vshrl.u32 %v1660, 7
  %v1662 = vsub.s32 %v1659, %v1661
  %v1663 = vrot.slane %v1656, %v1662
  %v1665 = vmul.f32 %v1644, %v1663
  %v1667 = vlaneseq
  %v1668 = vshrl.u32 %v1667, 7
  %v1669 = vsub.s32 0, %v1668
  %v1670 = vrot.slane %v1665, %v1669
  %v1671 = vlaneseq
  %v1672 = vshrl.u32 %v1671, 7
  %v1673 = vsub.s32 1, %v1672
  %v1674 = vrot.slane %v1665, %v1673
  %vm1677 = vcmask 1040384
  %v1678 = vsel %vm1677, %v1670, 0.0
  %v1679 = vsel %vm1677, %v1674, 0.0
  %v1680 = vadd.f32 %v1678, %v1679
  %1681 = vadd.xlane.f32.xlu0 %v1680
  %v1682 = vpop.xlane.xlu0 %1681
  %vm1683 = vcmask 0
  %1684 = vst.msk [vmem:[%s8] sm:$0x1] %vm1683, %v1682
  %s1685 = scalar_lea.vmem %s0, 2
  %v1686 = vld [vmem:[%s1685] sm:$0x3]
  %s1687 = scalar_lea.vmem %s2, 2
  %v1688 = vld [vmem:[%s1687] sm:$0x3]
  %s1689 = scalar_lea.vmem %s1, 256
  %v1690 = vld [vmem:[%s1689] sm:$0xff]
  %v1691 = vld [vmem:[%s1689 + $0x8] sm:$0xff]
  %v1692 = vld [vmem:[%s1689 + $0x10] sm:$0xff]
  %v1693 = vld [vmem:[%s1689 + $0x18] sm:$0xff]
  %v1694 = vld [vmem:[%s1689 + $0x20] sm:$0xff]
  %v1695 = vld [vmem:[%s1689 + $0x28] sm:$0xff]
  %v1696 = vld [vmem:[%s1689 + $0x30] sm:$0xff]
  %v1697 = vld [vmem:[%s1689 + $0x38] sm:$0xff]
  %v1698 = vld [vmem:[%s1689 + $0x40] sm:$0xff]
  %v1699 = vld [vmem:[%s1689 + $0x48] sm:$0xff]
  %v1700 = vld [vmem:[%s1689 + $0x50] sm:$0xff]
  %v1701 = vld [vmem:[%s1689 + $0x58] sm:$0xff]
  %v1702 = vld [vmem:[%s1689 + $0x60] sm:$0xff]
  %v1703 = vld [vmem:[%s1689 + $0x68] sm:$0xff]
  %v1704 = vld [vmem:[%s1689 + $0x70] sm:$0xff]
  %v1705 = vld [vmem:[%s1689 + $0x78] sm:$0xff]
  %v1706 = vld [vmem:[%s1689 + $0x80] sm:$0xff]
  %v1707 = vld [vmem:[%s1689 + $0x88] sm:$0xff]
  %v1708 = vld [vmem:[%s1689 + $0x90] sm:$0xff]
  %v1709 = vld [vmem:[%s1689 + $0x98] sm:$0xff]
  %v1710 = vld [vmem:[%s1689 + $0xa0] sm:$0xff]
  %v1711 = vld [vmem:[%s1689 + $0xa8] sm:$0xff]
  %v1712 = vld [vmem:[%s1689 + $0xb0] sm:$0xff]
  %v1713 = vld [vmem:[%s1689 + $0xb8] sm:$0xff]
  %v1714 = vld [vmem:[%s1689 + $0xc0] sm:$0xff]
  %v1715 = vld [vmem:[%s1689 + $0xc8] sm:$0xff]
  %v1716 = vld [vmem:[%s1689 + $0xd0] sm:$0xff]
  %v1717 = vld [vmem:[%s1689 + $0xd8] sm:$0xff]
  %v1718 = vld [vmem:[%s1689 + $0xe0] sm:$0xff]
  %v1719 = vld [vmem:[%s1689 + $0xe8] sm:$0xff]
  %v1720 = vld [vmem:[%s1689 + $0xf0] sm:$0xff]
  %v1721 = vld [vmem:[%s1689 + $0xf8] sm:$0xff]
  %s1722 = scalar_lea.vmem %s3, 256
  %v1723 = vld [vmem:[%s1722] sm:$0xff]
  %v1724 = vld [vmem:[%s1722 + $0x8] sm:$0xff]
  %v1725 = vld [vmem:[%s1722 + $0x10] sm:$0xff]
  %v1726 = vld [vmem:[%s1722 + $0x18] sm:$0xff]
  %v1727 = vld [vmem:[%s1722 + $0x20] sm:$0xff]
  %v1728 = vld [vmem:[%s1722 + $0x28] sm:$0xff]
  %v1729 = vld [vmem:[%s1722 + $0x30] sm:$0xff]
  %v1730 = vld [vmem:[%s1722 + $0x38] sm:$0xff]
  %v1731 = vld [vmem:[%s1722 + $0x40] sm:$0xff]
  %v1732 = vld [vmem:[%s1722 + $0x48] sm:$0xff]
  %v1733 = vld [vmem:[%s1722 + $0x50] sm:$0xff]
  %v1734 = vld [vmem:[%s1722 + $0x58] sm:$0xff]
  %v1735 = vld [vmem:[%s1722 + $0x60] sm:$0xff]
  %v1736 = vld [vmem:[%s1722 + $0x68] sm:$0xff]
  %v1737 = vld [vmem:[%s1722 + $0x70] sm:$0xff]
  %v1738 = vld [vmem:[%s1722 + $0x78] sm:$0xff]
  %v1739 = vld [vmem:[%s1722 + $0x80] sm:$0xff]
  %v1740 = vld [vmem:[%s1722 + $0x88] sm:$0xff]
  %v1741 = vld [vmem:[%s1722 + $0x90] sm:$0xff]
  %v1742 = vld [vmem:[%s1722 + $0x98] sm:$0xff]
  %v1743 = vld [vmem:[%s1722 + $0xa0] sm:$0xff]
  %v1744 = vld [vmem:[%s1722 + $0xa8] sm:$0xff]
  %v1745 = vld [vmem:[%s1722 + $0xb0] sm:$0xff]
  %v1746 = vld [vmem:[%s1722 + $0xb8] sm:$0xff]
  %v1747 = vld [vmem:[%s1722 + $0xc0] sm:$0xff]
  %v1748 = vld [vmem:[%s1722 + $0xc8] sm:$0xff]
  %v1749 = vld [vmem:[%s1722 + $0xd0] sm:$0xff]
  %v1750 = vld [vmem:[%s1722 + $0xd8] sm:$0xff]
  %v1751 = vld [vmem:[%s1722 + $0xe0] sm:$0xff]
  %v1752 = vld [vmem:[%s1722 + $0xe8] sm:$0xff]
  %v1753 = vld [vmem:[%s1722 + $0xf0] sm:$0xff]
  %v1754 = vld [vmem:[%s1722 + $0xf8] sm:$0xff]
  %vm1755 = vcmp.gt.f32.partialorder %v1690, 0.5
  %vm1756 = vcmp.gt.f32.partialorder %v1691, 0.5
  %vm1757 = vcmp.gt.f32.partialorder %v1692, 0.5
  %vm1758 = vcmp.gt.f32.partialorder %v1693, 0.5
  %vm1759 = vcmp.gt.f32.partialorder %v1694, 0.5
  %vm1760 = vcmp.gt.f32.partialorder %v1695, 0.5
  %vm1761 = vcmp.gt.f32.partialorder %v1696, 0.5
  %vm1762 = vcmp.gt.f32.partialorder %v1697, 0.5
  %vm1763 = vcmp.gt.f32.partialorder %v1698, 0.5
  %vm1764 = vcmp.gt.f32.partialorder %v1699, 0.5
  %vm1765 = vcmp.gt.f32.partialorder %v1700, 0.5
  %vm1766 = vcmp.gt.f32.partialorder %v1701, 0.5
  %vm1767 = vcmp.gt.f32.partialorder %v1702, 0.5
  %vm1768 = vcmp.gt.f32.partialorder %v1703, 0.5
  %vm1769 = vcmp.gt.f32.partialorder %v1704, 0.5
  %vm1770 = vcmp.gt.f32.partialorder %v1705, 0.5
  %vm1771 = vcmp.gt.f32.partialorder %v1706, 0.5
  %vm1772 = vcmp.gt.f32.partialorder %v1707, 0.5
  %vm1773 = vcmp.gt.f32.partialorder %v1708, 0.5
  %vm1774 = vcmp.gt.f32.partialorder %v1709, 0.5
  %vm1775 = vcmp.gt.f32.partialorder %v1710, 0.5
  %vm1776 = vcmp.gt.f32.partialorder %v1711, 0.5
  %vm1777 = vcmp.gt.f32.partialorder %v1712, 0.5
  %vm1778 = vcmp.gt.f32.partialorder %v1713, 0.5
  %vm1779 = vcmp.gt.f32.partialorder %v1714, 0.5
  %vm1780 = vcmp.gt.f32.partialorder %v1715, 0.5
  %vm1781 = vcmp.gt.f32.partialorder %v1716, 0.5
  %vm1782 = vcmp.gt.f32.partialorder %v1717, 0.5
  %vm1783 = vcmp.gt.f32.partialorder %v1718, 0.5
  %vm1784 = vcmp.gt.f32.partialorder %v1719, 0.5
  %vm1785 = vcmp.gt.f32.partialorder %v1720, 0.5
  %vm1786 = vcmp.gt.f32.partialorder %v1721, 0.5
  %vm1787 = vcmp.gt.f32.partialorder %v1686, 0.5
  %v1788 = vsel %vm1755, 1, 0
  %v1789 = vsel %vm1756, 1, 0
  %v1790 = vsel %vm1757, 1, 0
  %v1791 = vsel %vm1758, 1, 0
  %v1792 = vsel %vm1759, 1, 0
  %v1793 = vsel %vm1760, 1, 0
  %v1794 = vsel %vm1761, 1, 0
  %v1795 = vsel %vm1762, 1, 0
  %v1796 = vsel %vm1763, 1, 0
  %v1797 = vsel %vm1764, 1, 0
  %v1798 = vsel %vm1765, 1, 0
  %v1799 = vsel %vm1766, 1, 0
  %v1800 = vsel %vm1767, 1, 0
  %v1801 = vsel %vm1768, 1, 0
  %v1802 = vsel %vm1769, 1, 0
  %v1803 = vsel %vm1770, 1, 0
  %v1804 = vsel %vm1771, 1, 0
  %v1805 = vsel %vm1772, 1, 0
  %v1806 = vsel %vm1773, 1, 0
  %v1807 = vsel %vm1774, 1, 0
  %v1808 = vsel %vm1775, 1, 0
  %v1809 = vsel %vm1776, 1, 0
  %v1810 = vsel %vm1777, 1, 0
  %v1811 = vsel %vm1778, 1, 0
  %v1812 = vsel %vm1779, 1, 0
  %v1813 = vsel %vm1780, 1, 0
  %v1814 = vsel %vm1781, 1, 0
  %v1815 = vsel %vm1782, 1, 0
  %v1816 = vsel %vm1783, 1, 0
  %v1817 = vsel %vm1784, 1, 0
  %v1818 = vsel %vm1785, 1, 0
  %v1819 = vsel %vm1786, 1, 0
  %1820 = vset.pattern.permute.xlu0 0
  %1821 = vperm.xlu0 %1820, %v1788
  %v1822 = vpop.permute.xlu0 %1821
  %1823 = vset.pattern.permute.xlu0 0
  %1824 = vperm.xlu0 %1823, %v1789
  %v1825 = vpop.permute.xlu0 %1824
  %1826 = vset.pattern.permute.xlu0 0
  %1827 = vperm.xlu0 %1826, %v1790
  %v1828 = vpop.permute.xlu0 %1827
  %1829 = vset.pattern.permute.xlu0 0
  %1830 = vperm.xlu0 %1829, %v1791
  %v1831 = vpop.permute.xlu0 %1830
  %1832 = vset.pattern.permute.xlu0 0
  %1833 = vperm.xlu0 %1832, %v1792
  %v1834 = vpop.permute.xlu0 %1833
  %1835 = vset.pattern.permute.xlu0 0
  %1836 = vperm.xlu0 %1835, %v1793
  %v1837 = vpop.permute.xlu0 %1836
  %1838 = vset.pattern.permute.xlu0 0
  %1839 = vperm.xlu0 %1838, %v1794
  %v1840 = vpop.permute.xlu0 %1839
  %1841 = vset.pattern.permute.xlu0 0
  %1842 = vperm.xlu0 %1841, %v1795
  %v1843 = vpop.permute.xlu0 %1842
  %1844 = vset.pattern.permute.xlu0 0
  %1845 = vperm.xlu0 %1844, %v1796
  %v1846 = vpop.permute.xlu0 %1845
  %1847 = vset.pattern.permute.xlu0 0
  %1848 = vperm.xlu0 %1847, %v1797
  %v1849 = vpop.permute.xlu0 %1848
  %1850 = vset.pattern.permute.xlu0 0
  %1851 = vperm.xlu0 %1850, %v1798
  %v1852 = vpop.permute.xlu0 %1851
  %1853 = vset.pattern.permute.xlu0 0
  %1854 = vperm.xlu0 %1853, %v1799
  %v1855 = vpop.permute.xlu0 %1854
  %1856 = vset.pattern.permute.xlu0 0
  %1857 = vperm.xlu0 %1856, %v1800
  %v1858 = vpop.permute.xlu0 %1857
  %1859 = vset.pattern.permute.xlu0 0
  %1860 = vperm.xlu0 %1859, %v1801
  %v1861 = vpop.permute.xlu0 %1860
  %1862 = vset.pattern.permute.xlu0 0
  %1863 = vperm.xlu0 %1862, %v1802
  %v1864 = vpop.permute.xlu0 %1863
  %1865 = vset.pattern.permute.xlu0 0
  %1866 = vperm.xlu0 %1865, %v1803
  %v1867 = vpop.permute.xlu0 %1866
  %1868 = vset.pattern.permute.xlu0 0
  %1869 = vperm.xlu0 %1868, %v1804
  %v1870 = vpop.permute.xlu0 %1869
  %1871 = vset.pattern.permute.xlu0 0
  %1872 = vperm.xlu0 %1871, %v1805
  %v1873 = vpop.permute.xlu0 %1872
  %1874 = vset.pattern.permute.xlu0 0
  %1875 = vperm.xlu0 %1874, %v1806
  %v1876 = vpop.permute.xlu0 %1875
  %1877 = vset.pattern.permute.xlu0 0
  %1878 = vperm.xlu0 %1877, %v1807
  %v1879 = vpop.permute.xlu0 %1878
  %1880 = vset.pattern.permute.xlu0 0
  %1881 = vperm.xlu0 %1880, %v1808
  %v1882 = vpop.permute.xlu0 %1881
  %1883 = vset.pattern.permute.xlu0 0
  %1884 = vperm.xlu0 %1883, %v1809
  %v1885 = vpop.permute.xlu0 %1884
  %1886 = vset.pattern.permute.xlu0 0
  %1887 = vperm.xlu0 %1886, %v1810
  %v1888 = vpop.permute.xlu0 %1887
  %1889 = vset.pattern.permute.xlu0 0
  %1890 = vperm.xlu0 %1889, %v1811
  %v1891 = vpop.permute.xlu0 %1890
  %1892 = vset.pattern.permute.xlu0 0
  %1893 = vperm.xlu0 %1892, %v1812
  %v1894 = vpop.permute.xlu0 %1893
  %1895 = vset.pattern.permute.xlu0 0
  %1896 = vperm.xlu0 %1895, %v1813
  %v1897 = vpop.permute.xlu0 %1896
  %1898 = vset.pattern.permute.xlu0 0
  %1899 = vperm.xlu0 %1898, %v1814
  %v1900 = vpop.permute.xlu0 %1899
  %1901 = vset.pattern.permute.xlu0 0
  %1902 = vperm.xlu0 %1901, %v1815
  %v1903 = vpop.permute.xlu0 %1902
  %1904 = vset.pattern.permute.xlu0 0
  %1905 = vperm.xlu0 %1904, %v1816
  %v1906 = vpop.permute.xlu0 %1905
  %1907 = vset.pattern.permute.xlu0 0
  %1908 = vperm.xlu0 %1907, %v1817
  %v1909 = vpop.permute.xlu0 %1908
  %1910 = vset.pattern.permute.xlu0 0
  %1911 = vperm.xlu0 %1910, %v1818
  %v1912 = vpop.permute.xlu0 %1911
  %1913 = vset.pattern.permute.xlu0 0
  %1914 = vperm.xlu0 %1913, %v1819
  %v1915 = vpop.permute.xlu0 %1914
  %vm1916 = vcmp.eq.s32.totalorder %v1822, 1
  %vm1917 = vcmp.eq.s32.totalorder %v1825, 1
  %vm1918 = vcmp.eq.s32.totalorder %v1828, 1
  %vm1919 = vcmp.eq.s32.totalorder %v1831, 1
  %vm1920 = vcmp.eq.s32.totalorder %v1834, 1
  %vm1921 = vcmp.eq.s32.totalorder %v1837, 1
  %vm1922 = vcmp.eq.s32.totalorder %v1840, 1
  %vm1923 = vcmp.eq.s32.totalorder %v1843, 1
  %vm1924 = vcmp.eq.s32.totalorder %v1846, 1
  %vm1925 = vcmp.eq.s32.totalorder %v1849, 1
  %vm1926 = vcmp.eq.s32.totalorder %v1852, 1
  %vm1927 = vcmp.eq.s32.totalorder %v1855, 1
  %vm1928 = vcmp.eq.s32.totalorder %v1858, 1
  %vm1929 = vcmp.eq.s32.totalorder %v1861, 1
  %vm1930 = vcmp.eq.s32.totalorder %v1864, 1
  %vm1931 = vcmp.eq.s32.totalorder %v1867, 1
  %vm1932 = vcmp.eq.s32.totalorder %v1870, 1
  %vm1933 = vcmp.eq.s32.totalorder %v1873, 1
  %vm1934 = vcmp.eq.s32.totalorder %v1876, 1
  %vm1935 = vcmp.eq.s32.totalorder %v1879, 1
  %vm1936 = vcmp.eq.s32.totalorder %v1882, 1
  %vm1937 = vcmp.eq.s32.totalorder %v1885, 1
  %vm1938 = vcmp.eq.s32.totalorder %v1888, 1
  %vm1939 = vcmp.eq.s32.totalorder %v1891, 1
  %vm1940 = vcmp.eq.s32.totalorder %v1894, 1
  %vm1941 = vcmp.eq.s32.totalorder %v1897, 1
  %vm1942 = vcmp.eq.s32.totalorder %v1900, 1
  %vm1943 = vcmp.eq.s32.totalorder %v1903, 1
  %vm1944 = vcmp.eq.s32.totalorder %v1906, 1
  %vm1945 = vcmp.eq.s32.totalorder %v1909, 1
  %vm1946 = vcmp.eq.s32.totalorder %v1912, 1
  %vm1947 = vcmp.eq.s32.totalorder %v1915, 1
  %v1948 = vsel %vm1787, 1, 0
  %v1949 = vlaneseq
  %v1950 = vshrl.u32 %v1949, 7
  %v1951 = vsub.s32 0, %v1950
  %v1952 = vrot.slane %v1948, %v1951
  %v1953 = vlaneseq
  %v1954 = vshrl.u32 %v1953, 7
  %v1955 = vsub.s32 1, %v1954
  %v1956 = vrot.slane %v1948, %v1955
  %vm1957 = vcmp.eq.s32.totalorder %v1952, 1
  %vm1958 = vcmp.eq.s32.totalorder %v1956, 1
  %vm1959 = vmxor %vm1916, %vm1957
  %vm1960 = vmxor %vm1916, %vm1958
  %vm1961 = vmxor %vm1917, %vm1957
  %vm1962 = vmxor %vm1917, %vm1958
  %vm1963 = vmxor %vm1918, %vm1957
  %vm1964 = vmxor %vm1918, %vm1958
  %vm1965 = vmxor %vm1919, %vm1957
  %vm1966 = vmxor %vm1919, %vm1958
  %vm1967 = vmxor %vm1920, %vm1957
  %vm1968 = vmxor %vm1920, %vm1958
  %vm1969 = vmxor %vm1921, %vm1957
  %vm1970 = vmxor %vm1921, %vm1958
  %vm1971 = vmxor %vm1922, %vm1957
  %vm1972 = vmxor %vm1922, %vm1958
  %vm1973 = vmxor %vm1923, %vm1957
  %vm1974 = vmxor %vm1923, %vm1958
  %vm1975 = vmxor %vm1924, %vm1957
  %vm1976 = vmxor %vm1924, %vm1958
  %vm1977 = vmxor %vm1925, %vm1957
  %vm1978 = vmxor %vm1925, %vm1958
  %vm1979 = vmxor %vm1926, %vm1957
  %vm1980 = vmxor %vm1926, %vm1958
  %vm1981 = vmxor %vm1927, %vm1957
  %vm1982 = vmxor %vm1927, %vm1958
  %vm1983 = vmxor %vm1928, %vm1957
  %vm1984 = vmxor %vm1928, %vm1958
  %vm1985 = vmxor %vm1929, %vm1957
  %vm1986 = vmxor %vm1929, %vm1958
  %vm1987 = vmxor %vm1930, %vm1957
  %vm1988 = vmxor %vm1930, %vm1958
  %vm1989 = vmxor %vm1931, %vm1957
  %vm1990 = vmxor %vm1931, %vm1958
  %vm1991 = vmxor %vm1932, %vm1957
  %vm1992 = vmxor %vm1932, %vm1958
  %vm1993 = vmxor %vm1933, %vm1957
  %vm1994 = vmxor %vm1933, %vm1958
  %vm1995 = vmxor %vm1934, %vm1957
  %vm1996 = vmxor %vm1934, %vm1958
  %vm1997 = vmxor %vm1935, %vm1957
  %vm1998 = vmxor %vm1935, %vm1958
  %vm1999 = vmxor %vm1936, %vm1957
  %vm2000 = vmxor %vm1936, %vm1958
  %vm2001 = vmxor %vm1937, %vm1957
  %vm2002 = vmxor %vm1937, %vm1958
  %vm2003 = vmxor %vm1938, %vm1957
  %vm2004 = vmxor %vm1938, %vm1958
  %vm2005 = vmxor %vm1939, %vm1957
  %vm2006 = vmxor %vm1939, %vm1958
  %vm2007 = vmxor %vm1940, %vm1957
  %vm2008 = vmxor %vm1940, %vm1958
  %vm2009 = vmxor %vm1941, %vm1957
  %vm2010 = vmxor %vm1941, %vm1958
  %vm2011 = vmxor %vm1942, %vm1957
  %vm2012 = vmxor %vm1942, %vm1958
  %vm2013 = vmxor %vm1943, %vm1957
  %vm2014 = vmxor %vm1943, %vm1958
  %vm2015 = vmxor %vm1944, %vm1957
  %vm2016 = vmxor %vm1944, %vm1958
  %vm2017 = vmxor %vm1945, %vm1957
  %vm2018 = vmxor %vm1945, %vm1958
  %vm2019 = vmxor %vm1946, %vm1957
  %vm2020 = vmxor %vm1946, %vm1958
  %vm2021 = vmxor %vm1947, %vm1957
  %vm2022 = vmxor %vm1947, %vm1958
  %v2023 = vsel %vm1959, %v693, 1e+30
  %v2024 = vsel %vm1960, %v694, 1e+30
  %v2025 = vsel %vm1961, %v695, 1e+30
  %v2026 = vsel %vm1962, %v696, 1e+30
  %v2027 = vsel %vm1963, %v697, 1e+30
  %v2028 = vsel %vm1964, %v698, 1e+30
  %v2029 = vsel %vm1965, %v699, 1e+30
  %v2030 = vsel %vm1966, %v700, 1e+30
  %v2031 = vsel %vm1967, %v701, 1e+30
  %v2032 = vsel %vm1968, %v702, 1e+30
  %v2033 = vsel %vm1969, %v703, 1e+30
  %v2034 = vsel %vm1970, %v704, 1e+30
  %v2035 = vsel %vm1971, %v705, 1e+30
  %v2036 = vsel %vm1972, %v706, 1e+30
  %v2037 = vsel %vm1973, %v707, 1e+30
  %v2038 = vsel %vm1974, %v708, 1e+30
  %v2039 = vsel %vm1975, %v709, 1e+30
  %v2040 = vsel %vm1976, %v710, 1e+30
  %v2041 = vsel %vm1977, %v711, 1e+30
  %v2042 = vsel %vm1978, %v712, 1e+30
  %v2043 = vsel %vm1979, %v713, 1e+30
  %v2044 = vsel %vm1980, %v714, 1e+30
  %v2045 = vsel %vm1981, %v715, 1e+30
  %v2046 = vsel %vm1982, %v716, 1e+30
  %v2047 = vsel %vm1983, %v717, 1e+30
  %v2048 = vsel %vm1984, %v718, 1e+30
  %v2049 = vsel %vm1985, %v719, 1e+30
  %v2050 = vsel %vm1986, %v720, 1e+30
  %v2051 = vsel %vm1987, %v721, 1e+30
  %v2052 = vsel %vm1988, %v722, 1e+30
  %v2053 = vsel %vm1989, %v723, 1e+30
  %v2054 = vsel %vm1990, %v724, 1e+30
  %v2055 = vsel %vm1991, %v725, 1e+30
  %v2056 = vsel %vm1992, %v726, 1e+30
  %v2057 = vsel %vm1993, %v727, 1e+30
  %v2058 = vsel %vm1994, %v728, 1e+30
  %v2059 = vsel %vm1995, %v729, 1e+30
  %v2060 = vsel %vm1996, %v730, 1e+30
  %v2061 = vsel %vm1997, %v731, 1e+30
  %v2062 = vsel %vm1998, %v732, 1e+30
  %v2063 = vsel %vm1999, %v733, 1e+30
  %v2064 = vsel %vm2000, %v734, 1e+30
  %v2065 = vsel %vm2001, %v735, 1e+30
  %v2066 = vsel %vm2002, %v736, 1e+30
  %v2067 = vsel %vm2003, %v737, 1e+30
  %v2068 = vsel %vm2004, %v738, 1e+30
  %v2069 = vsel %vm2005, %v739, 1e+30
  %v2070 = vsel %vm2006, %v740, 1e+30
  %v2071 = vsel %vm2007, %v741, 1e+30
  %v2072 = vsel %vm2008, %v742, 1e+30
  %v2073 = vsel %vm2009, %v743, 1e+30
  %v2074 = vsel %vm2010, %v744, 1e+30
  %v2075 = vsel %vm2011, %v745, 1e+30
  %v2076 = vsel %vm2012, %v746, 1e+30
  %v2077 = vsel %vm2013, %v747, 1e+30
  %v2078 = vsel %vm2014, %v748, 1e+30
  %v2079 = vsel %vm2015, %v749, 1e+30
  %v2080 = vsel %vm2016, %v750, 1e+30
  %v2081 = vsel %vm2017, %v751, 1e+30
  %v2082 = vsel %vm2018, %v752, 1e+30
  %v2083 = vsel %vm2019, %v753, 1e+30
  %v2084 = vsel %vm2020, %v754, 1e+30
  %v2085 = vsel %vm2021, %v755, 1e+30
  %v2086 = vsel %vm2022, %v756, 1e+30
  %v2087 = vmin.f32 %v2023, %v2027
  %v2088 = vmin.f32 %v2025, %v2029
  %v2089 = vmin.f32 %v2087, %v2031
  %v2090 = vmin.f32 %v2088, %v2033
  %v2091 = vmin.f32 %v2089, %v2035
  %v2092 = vmin.f32 %v2090, %v2037
  %v2093 = vmin.f32 %v2091, %v2039
  %v2094 = vmin.f32 %v2092, %v2041
  %v2095 = vmin.f32 %v2093, %v2043
  %v2096 = vmin.f32 %v2094, %v2045
  %v2097 = vmin.f32 %v2095, %v2047
  %v2098 = vmin.f32 %v2096, %v2049
  %v2099 = vmin.f32 %v2097, %v2051
  %v2100 = vmin.f32 %v2098, %v2053
  %v2101 = vmin.f32 %v2099, %v2055
  %v2102 = vmin.f32 %v2100, %v2057
  %v2103 = vmin.f32 %v2101, %v2059
  %v2104 = vmin.f32 %v2102, %v2061
  %v2105 = vmin.f32 %v2103, %v2063
  %v2106 = vmin.f32 %v2104, %v2065
  %v2107 = vmin.f32 %v2105, %v2067
  %v2108 = vmin.f32 %v2106, %v2069
  %v2109 = vmin.f32 %v2107, %v2071
  %v2110 = vmin.f32 %v2108, %v2073
  %v2111 = vmin.f32 %v2109, %v2075
  %v2112 = vmin.f32 %v2110, %v2077
  %v2113 = vmin.f32 %v2111, %v2079
  %v2114 = vmin.f32 %v2112, %v2081
  %v2115 = vmin.f32 %v2113, %v2083
  %v2116 = vmin.f32 %v2114, %v2085
  %v2117 = vmin.f32 %v2115, %v2116
  %v2118 = vrot.slane %v2117, 4
  %v2119 = vmin.f32 %v2117, %v2118
  %v2120 = vrot.slane %v2119, 2
  %v2121 = vmin.f32 %v2119, %v2120
  %v2122 = vrot.slane %v2121, 1
  %v2123 = vmin.f32 %v2121, %v2122
  %v2124 = vmin.f32 %v2024, %v2028
  %v2125 = vmin.f32 %v2026, %v2030
  %v2126 = vmin.f32 %v2124, %v2032
  %v2127 = vmin.f32 %v2125, %v2034
  %v2128 = vmin.f32 %v2126, %v2036
  %v2129 = vmin.f32 %v2127, %v2038
  %v2130 = vmin.f32 %v2128, %v2040
  %v2131 = vmin.f32 %v2129, %v2042
  %v2132 = vmin.f32 %v2130, %v2044
  %v2133 = vmin.f32 %v2131, %v2046
  %v2134 = vmin.f32 %v2132, %v2048
  %v2135 = vmin.f32 %v2133, %v2050
  %v2136 = vmin.f32 %v2134, %v2052
  %v2137 = vmin.f32 %v2135, %v2054
  %v2138 = vmin.f32 %v2136, %v2056
  %v2139 = vmin.f32 %v2137, %v2058
  %v2140 = vmin.f32 %v2138, %v2060
  %v2141 = vmin.f32 %v2139, %v2062
  %v2142 = vmin.f32 %v2140, %v2064
  %v2143 = vmin.f32 %v2141, %v2066
  %v2144 = vmin.f32 %v2142, %v2068
  %v2145 = vmin.f32 %v2143, %v2070
  %v2146 = vmin.f32 %v2144, %v2072
  %v2147 = vmin.f32 %v2145, %v2074
  %v2148 = vmin.f32 %v2146, %v2076
  %v2149 = vmin.f32 %v2147, %v2078
  %v2150 = vmin.f32 %v2148, %v2080
  %v2151 = vmin.f32 %v2149, %v2082
  %v2152 = vmin.f32 %v2150, %v2084
  %v2153 = vmin.f32 %v2151, %v2086
  %v2154 = vmin.f32 %v2152, %v2153
  %v2155 = vrot.slane %v2154, 4
  %v2156 = vmin.f32 %v2154, %v2155
  %v2157 = vrot.slane %v2156, 2
  %v2158 = vmin.f32 %v2156, %v2157
  %v2159 = vrot.slane %v2158, 1
  %v2160 = vmin.f32 %v2158, %v2159
  %vm2161 = vcmp.gt.f32.partialorder %v2123, 5e+29
  %vm2162 = vcmp.gt.f32.partialorder %v2160, 5e+29
  %v2163 = vsel %vm2161, 0.0, %v2123
  %v2164 = vsel %vm2162, 0.0, %v2160
  %vm2165 = vcmp.gt.f32.partialorder %v1723, 0.5
  %vm2166 = vcmp.gt.f32.partialorder %v1724, 0.5
  %vm2167 = vcmp.gt.f32.partialorder %v1725, 0.5
  %vm2168 = vcmp.gt.f32.partialorder %v1726, 0.5
  %vm2169 = vcmp.gt.f32.partialorder %v1727, 0.5
  %vm2170 = vcmp.gt.f32.partialorder %v1728, 0.5
  %vm2171 = vcmp.gt.f32.partialorder %v1729, 0.5
  %vm2172 = vcmp.gt.f32.partialorder %v1730, 0.5
  %vm2173 = vcmp.gt.f32.partialorder %v1731, 0.5
  %vm2174 = vcmp.gt.f32.partialorder %v1732, 0.5
  %vm2175 = vcmp.gt.f32.partialorder %v1733, 0.5
  %vm2176 = vcmp.gt.f32.partialorder %v1734, 0.5
  %vm2177 = vcmp.gt.f32.partialorder %v1735, 0.5
  %vm2178 = vcmp.gt.f32.partialorder %v1736, 0.5
  %vm2179 = vcmp.gt.f32.partialorder %v1737, 0.5
  %vm2180 = vcmp.gt.f32.partialorder %v1738, 0.5
  %vm2181 = vcmp.gt.f32.partialorder %v1739, 0.5
  %vm2182 = vcmp.gt.f32.partialorder %v1740, 0.5
  %vm2183 = vcmp.gt.f32.partialorder %v1741, 0.5
  %vm2184 = vcmp.gt.f32.partialorder %v1742, 0.5
  %vm2185 = vcmp.gt.f32.partialorder %v1743, 0.5
  %vm2186 = vcmp.gt.f32.partialorder %v1744, 0.5
  %vm2187 = vcmp.gt.f32.partialorder %v1745, 0.5
  %vm2188 = vcmp.gt.f32.partialorder %v1746, 0.5
  %vm2189 = vcmp.gt.f32.partialorder %v1747, 0.5
  %vm2190 = vcmp.gt.f32.partialorder %v1748, 0.5
  %vm2191 = vcmp.gt.f32.partialorder %v1749, 0.5
  %vm2192 = vcmp.gt.f32.partialorder %v1750, 0.5
  %vm2193 = vcmp.gt.f32.partialorder %v1751, 0.5
  %vm2194 = vcmp.gt.f32.partialorder %v1752, 0.5
  %vm2195 = vcmp.gt.f32.partialorder %v1753, 0.5
  %vm2196 = vcmp.gt.f32.partialorder %v1754, 0.5
  %vm2197 = vcmp.gt.f32.partialorder %v1688, 0.5
  %v2198 = vsel %vm2165, 1, 0
  %v2199 = vsel %vm2166, 1, 0
  %v2200 = vsel %vm2167, 1, 0
  %v2201 = vsel %vm2168, 1, 0
  %v2202 = vsel %vm2169, 1, 0
  %v2203 = vsel %vm2170, 1, 0
  %v2204 = vsel %vm2171, 1, 0
  %v2205 = vsel %vm2172, 1, 0
  %v2206 = vsel %vm2173, 1, 0
  %v2207 = vsel %vm2174, 1, 0
  %v2208 = vsel %vm2175, 1, 0
  %v2209 = vsel %vm2176, 1, 0
  %v2210 = vsel %vm2177, 1, 0
  %v2211 = vsel %vm2178, 1, 0
  %v2212 = vsel %vm2179, 1, 0
  %v2213 = vsel %vm2180, 1, 0
  %v2214 = vsel %vm2181, 1, 0
  %v2215 = vsel %vm2182, 1, 0
  %v2216 = vsel %vm2183, 1, 0
  %v2217 = vsel %vm2184, 1, 0
  %v2218 = vsel %vm2185, 1, 0
  %v2219 = vsel %vm2186, 1, 0
  %v2220 = vsel %vm2187, 1, 0
  %v2221 = vsel %vm2188, 1, 0
  %v2222 = vsel %vm2189, 1, 0
  %v2223 = vsel %vm2190, 1, 0
  %v2224 = vsel %vm2191, 1, 0
  %v2225 = vsel %vm2192, 1, 0
  %v2226 = vsel %vm2193, 1, 0
  %v2227 = vsel %vm2194, 1, 0
  %v2228 = vsel %vm2195, 1, 0
  %v2229 = vsel %vm2196, 1, 0
  %2230 = vset.pattern.permute.xlu0 0
  %2231 = vperm.xlu0 %2230, %v2198
  %v2232 = vpop.permute.xlu0 %2231
  %2233 = vset.pattern.permute.xlu0 0
  %2234 = vperm.xlu0 %2233, %v2199
  %v2235 = vpop.permute.xlu0 %2234
  %2236 = vset.pattern.permute.xlu0 0
  %2237 = vperm.xlu0 %2236, %v2200
  %v2238 = vpop.permute.xlu0 %2237
  %2239 = vset.pattern.permute.xlu0 0
  %2240 = vperm.xlu0 %2239, %v2201
  %v2241 = vpop.permute.xlu0 %2240
  %2242 = vset.pattern.permute.xlu0 0
  %2243 = vperm.xlu0 %2242, %v2202
  %v2244 = vpop.permute.xlu0 %2243
  %2245 = vset.pattern.permute.xlu0 0
  %2246 = vperm.xlu0 %2245, %v2203
  %v2247 = vpop.permute.xlu0 %2246
  %2248 = vset.pattern.permute.xlu0 0
  %2249 = vperm.xlu0 %2248, %v2204
  %v2250 = vpop.permute.xlu0 %2249
  %2251 = vset.pattern.permute.xlu0 0
  %2252 = vperm.xlu0 %2251, %v2205
  %v2253 = vpop.permute.xlu0 %2252
  %2254 = vset.pattern.permute.xlu0 0
  %2255 = vperm.xlu0 %2254, %v2206
  %v2256 = vpop.permute.xlu0 %2255
  %2257 = vset.pattern.permute.xlu0 0
  %2258 = vperm.xlu0 %2257, %v2207
  %v2259 = vpop.permute.xlu0 %2258
  %2260 = vset.pattern.permute.xlu0 0
  %2261 = vperm.xlu0 %2260, %v2208
  %v2262 = vpop.permute.xlu0 %2261
  %2263 = vset.pattern.permute.xlu0 0
  %2264 = vperm.xlu0 %2263, %v2209
  %v2265 = vpop.permute.xlu0 %2264
  %2266 = vset.pattern.permute.xlu0 0
  %2267 = vperm.xlu0 %2266, %v2210
  %v2268 = vpop.permute.xlu0 %2267
  %2269 = vset.pattern.permute.xlu0 0
  %2270 = vperm.xlu0 %2269, %v2211
  %v2271 = vpop.permute.xlu0 %2270
  %2272 = vset.pattern.permute.xlu0 0
  %2273 = vperm.xlu0 %2272, %v2212
  %v2274 = vpop.permute.xlu0 %2273
  %2275 = vset.pattern.permute.xlu0 0
  %2276 = vperm.xlu0 %2275, %v2213
  %v2277 = vpop.permute.xlu0 %2276
  %2278 = vset.pattern.permute.xlu0 0
  %2279 = vperm.xlu0 %2278, %v2214
  %v2280 = vpop.permute.xlu0 %2279
  %2281 = vset.pattern.permute.xlu0 0
  %2282 = vperm.xlu0 %2281, %v2215
  %v2283 = vpop.permute.xlu0 %2282
  %2284 = vset.pattern.permute.xlu0 0
  %2285 = vperm.xlu0 %2284, %v2216
  %v2286 = vpop.permute.xlu0 %2285
  %2287 = vset.pattern.permute.xlu0 0
  %2288 = vperm.xlu0 %2287, %v2217
  %v2289 = vpop.permute.xlu0 %2288
  %2290 = vset.pattern.permute.xlu0 0
  %2291 = vperm.xlu0 %2290, %v2218
  %v2292 = vpop.permute.xlu0 %2291
  %2293 = vset.pattern.permute.xlu0 0
  %2294 = vperm.xlu0 %2293, %v2219
  %v2295 = vpop.permute.xlu0 %2294
  %2296 = vset.pattern.permute.xlu0 0
  %2297 = vperm.xlu0 %2296, %v2220
  %v2298 = vpop.permute.xlu0 %2297
  %2299 = vset.pattern.permute.xlu0 0
  %2300 = vperm.xlu0 %2299, %v2221
  %v2301 = vpop.permute.xlu0 %2300
  %2302 = vset.pattern.permute.xlu0 0
  %2303 = vperm.xlu0 %2302, %v2222
  %v2304 = vpop.permute.xlu0 %2303
  %2305 = vset.pattern.permute.xlu0 0
  %2306 = vperm.xlu0 %2305, %v2223
  %v2307 = vpop.permute.xlu0 %2306
  %2308 = vset.pattern.permute.xlu0 0
  %2309 = vperm.xlu0 %2308, %v2224
  %v2310 = vpop.permute.xlu0 %2309
  %2311 = vset.pattern.permute.xlu0 0
  %2312 = vperm.xlu0 %2311, %v2225
  %v2313 = vpop.permute.xlu0 %2312
  %2314 = vset.pattern.permute.xlu0 0
  %2315 = vperm.xlu0 %2314, %v2226
  %v2316 = vpop.permute.xlu0 %2315
  %2317 = vset.pattern.permute.xlu0 0
  %2318 = vperm.xlu0 %2317, %v2227
  %v2319 = vpop.permute.xlu0 %2318
  %2320 = vset.pattern.permute.xlu0 0
  %2321 = vperm.xlu0 %2320, %v2228
  %v2322 = vpop.permute.xlu0 %2321
  %2323 = vset.pattern.permute.xlu0 0
  %2324 = vperm.xlu0 %2323, %v2229
  %v2325 = vpop.permute.xlu0 %2324
  %vm2326 = vcmp.eq.s32.totalorder %v2232, 1
  %vm2327 = vcmp.eq.s32.totalorder %v2235, 1
  %vm2328 = vcmp.eq.s32.totalorder %v2238, 1
  %vm2329 = vcmp.eq.s32.totalorder %v2241, 1
  %vm2330 = vcmp.eq.s32.totalorder %v2244, 1
  %vm2331 = vcmp.eq.s32.totalorder %v2247, 1
  %vm2332 = vcmp.eq.s32.totalorder %v2250, 1
  %vm2333 = vcmp.eq.s32.totalorder %v2253, 1
  %vm2334 = vcmp.eq.s32.totalorder %v2256, 1
  %vm2335 = vcmp.eq.s32.totalorder %v2259, 1
  %vm2336 = vcmp.eq.s32.totalorder %v2262, 1
  %vm2337 = vcmp.eq.s32.totalorder %v2265, 1
  %vm2338 = vcmp.eq.s32.totalorder %v2268, 1
  %vm2339 = vcmp.eq.s32.totalorder %v2271, 1
  %vm2340 = vcmp.eq.s32.totalorder %v2274, 1
  %vm2341 = vcmp.eq.s32.totalorder %v2277, 1
  %vm2342 = vcmp.eq.s32.totalorder %v2280, 1
  %vm2343 = vcmp.eq.s32.totalorder %v2283, 1
  %vm2344 = vcmp.eq.s32.totalorder %v2286, 1
  %vm2345 = vcmp.eq.s32.totalorder %v2289, 1
  %vm2346 = vcmp.eq.s32.totalorder %v2292, 1
  %vm2347 = vcmp.eq.s32.totalorder %v2295, 1
  %vm2348 = vcmp.eq.s32.totalorder %v2298, 1
  %vm2349 = vcmp.eq.s32.totalorder %v2301, 1
  %vm2350 = vcmp.eq.s32.totalorder %v2304, 1
  %vm2351 = vcmp.eq.s32.totalorder %v2307, 1
  %vm2352 = vcmp.eq.s32.totalorder %v2310, 1
  %vm2353 = vcmp.eq.s32.totalorder %v2313, 1
  %vm2354 = vcmp.eq.s32.totalorder %v2316, 1
  %vm2355 = vcmp.eq.s32.totalorder %v2319, 1
  %vm2356 = vcmp.eq.s32.totalorder %v2322, 1
  %vm2357 = vcmp.eq.s32.totalorder %v2325, 1
  %v2358 = vsel %vm2197, 1, 0
  %v2359 = vlaneseq
  %v2360 = vshrl.u32 %v2359, 7
  %v2361 = vsub.s32 0, %v2360
  %v2362 = vrot.slane %v2358, %v2361
  %v2363 = vlaneseq
  %v2364 = vshrl.u32 %v2363, 7
  %v2365 = vsub.s32 1, %v2364
  %v2366 = vrot.slane %v2358, %v2365
  %vm2367 = vcmp.eq.s32.totalorder %v2362, 1
  %vm2368 = vcmp.eq.s32.totalorder %v2366, 1
  %vm2369 = vmxor %vm2326, %vm2367
  %vm2370 = vmxor %vm2326, %vm2368
  %vm2371 = vmxor %vm2327, %vm2367
  %vm2372 = vmxor %vm2327, %vm2368
  %vm2373 = vmxor %vm2328, %vm2367
  %vm2374 = vmxor %vm2328, %vm2368
  %vm2375 = vmxor %vm2329, %vm2367
  %vm2376 = vmxor %vm2329, %vm2368
  %vm2377 = vmxor %vm2330, %vm2367
  %vm2378 = vmxor %vm2330, %vm2368
  %vm2379 = vmxor %vm2331, %vm2367
  %vm2380 = vmxor %vm2331, %vm2368
  %vm2381 = vmxor %vm2332, %vm2367
  %vm2382 = vmxor %vm2332, %vm2368
  %vm2383 = vmxor %vm2333, %vm2367
  %vm2384 = vmxor %vm2333, %vm2368
  %vm2385 = vmxor %vm2334, %vm2367
  %vm2386 = vmxor %vm2334, %vm2368
  %vm2387 = vmxor %vm2335, %vm2367
  %vm2388 = vmxor %vm2335, %vm2368
  %vm2389 = vmxor %vm2336, %vm2367
  %vm2390 = vmxor %vm2336, %vm2368
  %vm2391 = vmxor %vm2337, %vm2367
  %vm2392 = vmxor %vm2337, %vm2368
  %vm2393 = vmxor %vm2338, %vm2367
  %vm2394 = vmxor %vm2338, %vm2368
  %vm2395 = vmxor %vm2339, %vm2367
  %vm2396 = vmxor %vm2339, %vm2368
  %vm2397 = vmxor %vm2340, %vm2367
  %vm2398 = vmxor %vm2340, %vm2368
  %vm2399 = vmxor %vm2341, %vm2367
  %vm2400 = vmxor %vm2341, %vm2368
  %vm2401 = vmxor %vm2342, %vm2367
  %vm2402 = vmxor %vm2342, %vm2368
  %vm2403 = vmxor %vm2343, %vm2367
  %vm2404 = vmxor %vm2343, %vm2368
  %vm2405 = vmxor %vm2344, %vm2367
  %vm2406 = vmxor %vm2344, %vm2368
  %vm2407 = vmxor %vm2345, %vm2367
  %vm2408 = vmxor %vm2345, %vm2368
  %vm2409 = vmxor %vm2346, %vm2367
  %vm2410 = vmxor %vm2346, %vm2368
  %vm2411 = vmxor %vm2347, %vm2367
  %vm2412 = vmxor %vm2347, %vm2368
  %vm2413 = vmxor %vm2348, %vm2367
  %vm2414 = vmxor %vm2348, %vm2368
  %vm2415 = vmxor %vm2349, %vm2367
  %vm2416 = vmxor %vm2349, %vm2368
  %vm2417 = vmxor %vm2350, %vm2367
  %vm2418 = vmxor %vm2350, %vm2368
  %vm2419 = vmxor %vm2351, %vm2367
  %vm2420 = vmxor %vm2351, %vm2368
  %vm2421 = vmxor %vm2352, %vm2367
  %vm2422 = vmxor %vm2352, %vm2368
  %vm2423 = vmxor %vm2353, %vm2367
  %vm2424 = vmxor %vm2353, %vm2368
  %vm2425 = vmxor %vm2354, %vm2367
  %vm2426 = vmxor %vm2354, %vm2368
  %vm2427 = vmxor %vm2355, %vm2367
  %vm2428 = vmxor %vm2355, %vm2368
  %vm2429 = vmxor %vm2356, %vm2367
  %vm2430 = vmxor %vm2356, %vm2368
  %vm2431 = vmxor %vm2357, %vm2367
  %vm2432 = vmxor %vm2357, %vm2368
  %v2433 = vsel %vm2369, %v693, 1e+30
  %v2434 = vsel %vm2370, %v694, 1e+30
  %v2435 = vsel %vm2371, %v695, 1e+30
  %v2436 = vsel %vm2372, %v696, 1e+30
  %v2437 = vsel %vm2373, %v697, 1e+30
  %v2438 = vsel %vm2374, %v698, 1e+30
  %v2439 = vsel %vm2375, %v699, 1e+30
  %v2440 = vsel %vm2376, %v700, 1e+30
  %v2441 = vsel %vm2377, %v701, 1e+30
  %v2442 = vsel %vm2378, %v702, 1e+30
  %v2443 = vsel %vm2379, %v703, 1e+30
  %v2444 = vsel %vm2380, %v704, 1e+30
  %v2445 = vsel %vm2381, %v705, 1e+30
  %v2446 = vsel %vm2382, %v706, 1e+30
  %v2447 = vsel %vm2383, %v707, 1e+30
  %v2448 = vsel %vm2384, %v708, 1e+30
  %v2449 = vsel %vm2385, %v709, 1e+30
  %v2450 = vsel %vm2386, %v710, 1e+30
  %v2451 = vsel %vm2387, %v711, 1e+30
  %v2452 = vsel %vm2388, %v712, 1e+30
  %v2453 = vsel %vm2389, %v713, 1e+30
  %v2454 = vsel %vm2390, %v714, 1e+30
  %v2455 = vsel %vm2391, %v715, 1e+30
  %v2456 = vsel %vm2392, %v716, 1e+30
  %v2457 = vsel %vm2393, %v717, 1e+30
  %v2458 = vsel %vm2394, %v718, 1e+30
  %v2459 = vsel %vm2395, %v719, 1e+30
  %v2460 = vsel %vm2396, %v720, 1e+30
  %v2461 = vsel %vm2397, %v721, 1e+30
  %v2462 = vsel %vm2398, %v722, 1e+30
  %v2463 = vsel %vm2399, %v723, 1e+30
  %v2464 = vsel %vm2400, %v724, 1e+30
  %v2465 = vsel %vm2401, %v725, 1e+30
  %v2466 = vsel %vm2402, %v726, 1e+30
  %v2467 = vsel %vm2403, %v727, 1e+30
  %v2468 = vsel %vm2404, %v728, 1e+30
  %v2469 = vsel %vm2405, %v729, 1e+30
  %v2470 = vsel %vm2406, %v730, 1e+30
  %v2471 = vsel %vm2407, %v731, 1e+30
  %v2472 = vsel %vm2408, %v732, 1e+30
  %v2473 = vsel %vm2409, %v733, 1e+30
  %v2474 = vsel %vm2410, %v734, 1e+30
  %v2475 = vsel %vm2411, %v735, 1e+30
  %v2476 = vsel %vm2412, %v736, 1e+30
  %v2477 = vsel %vm2413, %v737, 1e+30
  %v2478 = vsel %vm2414, %v738, 1e+30
  %v2479 = vsel %vm2415, %v739, 1e+30
  %v2480 = vsel %vm2416, %v740, 1e+30
  %v2481 = vsel %vm2417, %v741, 1e+30
  %v2482 = vsel %vm2418, %v742, 1e+30
  %v2483 = vsel %vm2419, %v743, 1e+30
  %v2484 = vsel %vm2420, %v744, 1e+30
  %v2485 = vsel %vm2421, %v745, 1e+30
  %v2486 = vsel %vm2422, %v746, 1e+30
  %v2487 = vsel %vm2423, %v747, 1e+30
  %v2488 = vsel %vm2424, %v748, 1e+30
  %v2489 = vsel %vm2425, %v749, 1e+30
  %v2490 = vsel %vm2426, %v750, 1e+30
  %v2491 = vsel %vm2427, %v751, 1e+30
  %v2492 = vsel %vm2428, %v752, 1e+30
  %v2493 = vsel %vm2429, %v753, 1e+30
  %v2494 = vsel %vm2430, %v754, 1e+30
  %v2495 = vsel %vm2431, %v755, 1e+30
  %v2496 = vsel %vm2432, %v756, 1e+30
  %v2497 = vmin.f32 %v2433, %v2437
  %v2498 = vmin.f32 %v2435, %v2439
  %v2499 = vmin.f32 %v2497, %v2441
  %v2500 = vmin.f32 %v2498, %v2443
  %v2501 = vmin.f32 %v2499, %v2445
  %v2502 = vmin.f32 %v2500, %v2447
  %v2503 = vmin.f32 %v2501, %v2449
  %v2504 = vmin.f32 %v2502, %v2451
  %v2505 = vmin.f32 %v2503, %v2453
  %v2506 = vmin.f32 %v2504, %v2455
  %v2507 = vmin.f32 %v2505, %v2457
  %v2508 = vmin.f32 %v2506, %v2459
  %v2509 = vmin.f32 %v2507, %v2461
  %v2510 = vmin.f32 %v2508, %v2463
  %v2511 = vmin.f32 %v2509, %v2465
  %v2512 = vmin.f32 %v2510, %v2467
  %v2513 = vmin.f32 %v2511, %v2469
  %v2514 = vmin.f32 %v2512, %v2471
  %v2515 = vmin.f32 %v2513, %v2473
  %v2516 = vmin.f32 %v2514, %v2475
  %v2517 = vmin.f32 %v2515, %v2477
  %v2518 = vmin.f32 %v2516, %v2479
  %v2519 = vmin.f32 %v2517, %v2481
  %v2520 = vmin.f32 %v2518, %v2483
  %v2521 = vmin.f32 %v2519, %v2485
  %v2522 = vmin.f32 %v2520, %v2487
  %v2523 = vmin.f32 %v2521, %v2489
  %v2524 = vmin.f32 %v2522, %v2491
  %v2525 = vmin.f32 %v2523, %v2493
  %v2526 = vmin.f32 %v2524, %v2495
  %v2527 = vmin.f32 %v2525, %v2526
  %v2528 = vrot.slane %v2527, 4
  %v2529 = vmin.f32 %v2527, %v2528
  %v2530 = vrot.slane %v2529, 2
  %v2531 = vmin.f32 %v2529, %v2530
  %v2532 = vrot.slane %v2531, 1
  %v2533 = vmin.f32 %v2531, %v2532
  %v2534 = vmin.f32 %v2434, %v2438
  %v2535 = vmin.f32 %v2436, %v2440
  %v2536 = vmin.f32 %v2534, %v2442
  %v2537 = vmin.f32 %v2535, %v2444
  %v2538 = vmin.f32 %v2536, %v2446
  %v2539 = vmin.f32 %v2537, %v2448
  %v2540 = vmin.f32 %v2538, %v2450
  %v2541 = vmin.f32 %v2539, %v2452
  %v2542 = vmin.f32 %v2540, %v2454
  %v2543 = vmin.f32 %v2541, %v2456
  %v2544 = vmin.f32 %v2542, %v2458
  %v2545 = vmin.f32 %v2543, %v2460
  %v2546 = vmin.f32 %v2544, %v2462
  %v2547 = vmin.f32 %v2545, %v2464
  %v2548 = vmin.f32 %v2546, %v2466
  %v2549 = vmin.f32 %v2547, %v2468
  %v2550 = vmin.f32 %v2548, %v2470
  %v2551 = vmin.f32 %v2549, %v2472
  %v2552 = vmin.f32 %v2550, %v2474
  %v2553 = vmin.f32 %v2551, %v2476
  %v2554 = vmin.f32 %v2552, %v2478
  %v2555 = vmin.f32 %v2553, %v2480
  %v2556 = vmin.f32 %v2554, %v2482
  %v2557 = vmin.f32 %v2555, %v2484
  %v2558 = vmin.f32 %v2556, %v2486
  %v2559 = vmin.f32 %v2557, %v2488
  %v2560 = vmin.f32 %v2558, %v2490
  %v2561 = vmin.f32 %v2559, %v2492
  %v2562 = vmin.f32 %v2560, %v2494
  %v2563 = vmin.f32 %v2561, %v2496
  %v2564 = vmin.f32 %v2562, %v2563
  %v2565 = vrot.slane %v2564, 4
  %v2566 = vmin.f32 %v2564, %v2565
  %v2567 = vrot.slane %v2566, 2
  %v2568 = vmin.f32 %v2566, %v2567
  %v2569 = vrot.slane %v2568, 1
  %v2570 = vmin.f32 %v2568, %v2569
  %vm2571 = vcmp.gt.f32.partialorder %v2533, 5e+29
  %vm2572 = vcmp.gt.f32.partialorder %v2570, 5e+29
  %v2573 = vsel %vm2571, 0.0, %v2533
  %v2574 = vsel %vm2572, 0.0, %v2570
  %v2575 = vsub.f32 %v1686, %v1688
  %v2576 = vmul.f32 %v2575, %v2575
  %v2577 = vadd.f32 %v2163, %v2573
  %v2578 = vadd.f32 %v2164, %v2574
  %v2581 = vcombine.low %v2577, %v2578
  %v2583 = vunpack.c.l.s4 1966171168
  %v2584 = vunpack.c.0.s8 %v2583
  %v2585 = vlaneseq
  %v2586 = vshrl.u32 %v2585, 7
  %v2587 = vsub.s32 %v2584, %v2586
  %v2588 = vrot.slane %v2581, %v2587
  %v2590 = vunpack.c.l.s4 1966171168
  %v2591 = vunpack.c.0.s8 %v2590
  %v2592 = vlaneseq
  %v2593 = vshrl.u32 %v2592, 7
  %v2594 = vsub.s32 %v2591, %v2593
  %v2595 = vrot.slane %v2588, %v2594
  %v2597 = vmul.f32 %v2576, %v2595
  %v2599 = vlaneseq
  %v2600 = vshrl.u32 %v2599, 7
  %v2601 = vsub.s32 0, %v2600
  %v2602 = vrot.slane %v2597, %v2601
  %v2603 = vlaneseq
  %v2604 = vshrl.u32 %v2603, 7
  %v2605 = vsub.s32 1, %v2604
  %v2606 = vrot.slane %v2597, %v2605
  %v2609 = vsel %vm1677, %v2602, 0.0
  %v2610 = vsel %vm1677, %v2606, 0.0
  %v2611 = vadd.f32 %v2609, %v2610
  %2612 = vadd.xlane.f32.xlu0 %v2611
  %v2613 = vpop.xlane.xlu0 %2612
  %2614 = vst.msk [vmem:[%s8 + $0x1] sm:$0x1] %vm1683, %v2613
  // Predicated region
  $region34: #{tpu_custom_call.1} parent=0 // pred_check
    _
  $region35: #{tpu_custom_call.1} parent=0 // pred_check_branch
    %2616 = sbr.rel (0) target = $region37
  $region36: #{tpu_custom_call.1} parent=0 // pred_region
    _
  $region37: #{tpu_custom_call.1} parent=0 // pred_fallthru
    _
  // Predicated region
  $region38: #{tpu_custom_call.1} parent=0 // pred_check
    _
  $region39: #{tpu_custom_call.1} parent=0 // pred_check_branch
    %2618 = sbr.rel (0) target = $region41
  $region40: #{tpu_custom_call.1} parent=0 // pred_region
    _
  $region41: #{tpu_custom_call.1} parent=0 // pred_fallthru
    _

</llo_original>
